<compile_context>
chip_gen: v5e
topology: v5e:2x2
jax: 0.10.0
libtpu: 0.0.40
codegen_flags: <defaults>
</compile_context>

<pallas_src>
import math

import jax
import jax.numpy as jnp
from jax.experimental import pallas as pl
from jax.experimental.pallas import tpu as pltpu

# ---- model hyperparameters (small, consistent with the module) ----
D_MODEL = 32
NUM_HEADS = 4
D_FF = 64
D_K = D_MODEL // NUM_HEADS
LN_EPS = 1e-5  # PyTorch nn.LayerNorm default


def _layernorm(x, gamma, beta):
    # PyTorch LayerNorm: biased variance, eps inside the rsqrt.
    mean = jnp.mean(x, axis=-1, keepdims=True)
    var = jnp.mean((x - mean) ** 2, axis=-1, keepdims=True)
    return (x - mean) * jax.lax.rsqrt(var + LN_EPS) * gamma + beta


def encoder_layer_kernel(mask_ref, x_ref, wqkv_ref, wo_ref, w1_ref, w2_ref, vec_ref, o_ref):
    TB, S, D = x_ref.shape
    M = TB * S

    # Packed (1, .) vectors (rows of vec_ref); layout defined in _pack_params().
    bqkv = vec_ref[0:1, :3 * D]
    bo = vec_ref[1:2, :D]
    g1 = vec_ref[2:3, :D]
    be1 = vec_ref[3:4, :D]
    b1 = vec_ref[4:5, :D_FF]
    b2 = vec_ref[5:6, :D]
    g2 = vec_ref[6:7, :D]
    be2 = vec_ref[7:8, :D]

    x3 = x_ref[...]                      # (TB, S, D)
    xf = x3.reshape(M, D)                # flatten batch*seq onto the MXU M dim (layout-preserving)

    # --- fused QKV projection: one (M, D) @ (D, 3D) MXU matmul instead of three ---
    qkv = jnp.dot(xf, wqkv_ref[...], preferred_element_type=jnp.float32) + bqkv
    q = qkv[:, 0 * D:1 * D]
    k = qkv[:, 1 * D:2 * D]
    v = qkv[:, 2 * D:3 * D]

    # Mask bias, hoisted out of the head loop.  Adding -1e9 underflows to exactly 0 after the
    # exp, identical to PyTorch's masked_fill for any row with at least one unmasked key.
    bias = jnp.where(mask_ref[...] == 0.0, -1e9, 0.0)   # (TB, 1, S) -> broadcasts over queries

    scale = 1.0 / math.sqrt(D_K)
    attn = jnp.zeros((M, D), jnp.float32)
    for h in range(NUM_HEADS):           # static unroll (NUM_HEADS = 4)
        lo, hi = h * D_K, (h + 1) * D_K
        qh = q[:, lo:hi].reshape(TB, S, D_K)
        kh = k[:, lo:hi].reshape(TB, S, D_K)
        vh = v[:, lo:hi].reshape(TB, S, D_K)
        # scores / PV batched over the TB batch elements (leading batch dim).
        s = jnp.einsum('bqd,bkd->bqk', qh, kh,
                       preferred_element_type=jnp.float32) * scale + bias
        s = s - jnp.max(s, axis=-1, keepdims=True)
        e = jnp.exp(s)
        # EUP reciprocal instead of a VALU divide (approx=False keeps the 1e-4 tolerance safe).
        p = e * pl.reciprocal(jnp.sum(e, axis=-1, keepdims=True), approx=False)
        oh = jnp.einsum('bqk,bkd->bqd', p, vh, preferred_element_type=jnp.float32)
        # Fold W_o into the head loop: concat(heads) @ W_o == sum_h head_h @ W_o[h*dk:(h+1)*dk, :].
        # Avoids the lane-axis concatenate of head outputs; W_o slicing is a sublane slice.
        attn = attn + jnp.dot(oh.reshape(M, D_K), wo_ref[h * D_K:(h + 1) * D_K, :],
                              preferred_element_type=jnp.float32)

    # dropout(p) is identity at inference time
    x1 = _layernorm(xf + attn + bo, g1, be1)

    # --- position-wise feed forward on the flattened (M, D) slab ---
    h1 = jnp.maximum(jnp.dot(x1, w1_ref[...], preferred_element_type=jnp.float32) + b1, 0.0)
    ff = jnp.dot(h1, w2_ref[...], preferred_element_type=jnp.float32) + b2
    x2 = _layernorm(x1 + ff, g2, be2)

    o_ref[...] = x2.reshape(TB, S, D)


def _pack_params(params):
    """Fuse QKV weights/biases and pack all (1, .) vectors into one small array."""
    (wq, bq, wk, bk, wv, bv, wo, bo, g1, be1, w1, b1, w2, b2, g2, be2) = params
    wqkv = jnp.concatenate([wq, wk, wv], axis=1)          # (D, 3D)
    bqkv = jnp.concatenate([bq, bk, bv], axis=1)          # (1, 3D)
    packw = max(3 * D_MODEL, D_FF)

    def row(vec):
        vec = vec.reshape(1, -1).astype(jnp.float32)
        return jnp.pad(vec, ((0, 0), (0, packw - vec.shape[1])))

    vecs = jnp.concatenate(
        [row(bqkv), row(bo), row(g1), row(be1), row(b1), row(b2), row(g2), row(be2)], axis=0)
    return wqkv, wo, w1, w2, vecs                         # 5 operands instead of 16


def encoder_layer(x, mask, params):
    """x: [B, S, D] f32, mask: [B, 1, S] f32 (1=keep, 0=mask), params: flat tuple."""
    B, S, D = x.shape

    # Batch-tile size: aim for TB*S >= 128 rows per grid step (fills MXU M dim, amortizes the
    # per-step overhead).  For B*S >= 256 this automatically yields >= 2 "parallel" grid steps,
    # so both TensorCores on v7x get work; below that we prioritize per-step row count.
    tb = max(1, min(B, max(1, 128 // S)))
    bpad = pl.cdiv(B, tb) * tb
    if bpad != B:
        x = jnp.pad(x, ((0, bpad - B), (0, 0), (0, 0)))
        mask = jnp.pad(mask, ((0, bpad - B), (0, 0), (0, 0)), constant_values=1.0)

    wqkv, wo, w1, w2, vecs = _pack_params(params)

    in_specs = [
        pl.BlockSpec((tb, 1, S), lambda b: (b, 0, 0)),    # mask
        pl.BlockSpec((tb, S, D), lambda b: (b, 0, 0)),    # x
        pl.BlockSpec(wqkv.shape, lambda b: (0, 0)),       # fused QKV weight
        pl.BlockSpec(wo.shape, lambda b: (0, 0)),
        pl.BlockSpec(w1.shape, lambda b: (0, 0)),
        pl.BlockSpec(w2.shape, lambda b: (0, 0)),
        pl.BlockSpec(vecs.shape, lambda b: (0, 0)),       # packed biases/gammas/betas
    ]

    out = pl.pallas_call(
        encoder_layer_kernel,
        out_shape=jax.ShapeDtypeStruct((bpad, S, D), jnp.float32),
        grid_spec=pltpu.PrefetchScalarGridSpec(
            num_scalar_prefetch=0,
            grid=(bpad // tb,),
            in_specs=in_specs,
            out_specs=pl.BlockSpec((tb, S, D), lambda b: (b, 0, 0)),
        ),
        compiler_params=pltpu.CompilerParams(dimension_semantics=("parallel",)),
    )(mask, x, wqkv, wo, w1, w2, vecs)
    return out[:B]


# ------------------ pure-JAX reference (mirrors the PyTorch forward) ------------------
def reference_encoder_layer(x, mask, params):
    (wq, bq, wk, bk, wv, bv, wo, bo, g1, be1, w1, b1, w2, b2, g2, be2) = params
    B, S, D = x.shape

    def split_heads(t):
        return t.reshape(B, S, NUM_HEADS, D_K).transpose(0, 2, 1, 3)  # (B,H,S,dk)

    q = split_heads(x @ wq + bq)
    k = split_heads(x @ wk + bk)
    v = split_heads(x @ wv + bv)
    scores = jnp.einsum("bhqd,bhkd->bhqk", q, k) / math.sqrt(D_K)
    scores = jnp.where(mask[:, None, :, :] == 0.0, -1e9, scores)  # (B,1,1,S) broadcast
    probs = jax.nn.softmax(scores, axis=-1)
    attn = jnp.einsum("bhqk,bhkd->bhqd", probs, v)
    attn = attn.transpose(0, 2, 1, 3).reshape(B, S, D) @ wo + bo

    x1 = _layernorm(x + attn, g1, be1)
    ff = jnp.maximum(x1 @ w1 + b1, 0.0) @ w2 + b2
    return _layernorm(x1 + ff, g2, be2)


def make_params(key):
    ks = jax.random.split(key, 8)

    def lin(k, fan_in, fan_out):
        bound = 1.0 / math.sqrt(fan_in)
        kw, kb = jax.random.split(k)
        w = jax.random.uniform(kw, (fan_in, fan_out), jnp.float32, -bound, bound)
        b = jax.random.uniform(kb, (1, fan_out), jnp.float32, -bound, bound)
        return w, b

    wq, bq = lin(ks[0], D_MODEL, D_MODEL)
    wk, bk = lin(ks[1], D_MODEL, D_MODEL)
    wv, bv = lin(ks[2], D_MODEL, D_MODEL)
    wo, bo = lin(ks[3], D_MODEL, D_MODEL)
    w1, b1 = lin(ks[4], D_MODEL, D_FF)
    w2, b2 = lin(ks[5], D_FF, D_MODEL)
    g1 = jnp.ones((1, D_MODEL), jnp.float32)
    be1 = jnp.zeros((1, D_MODEL), jnp.float32)
    g2 = jnp.ones((1, D_MODEL), jnp.float32)
    be2 = jnp.zeros((1, D_MODEL), jnp.float32)
    return (wq, bq, wk, bk, wv, bv, wo, bo, g1, be1, w1, b1, w2, b2, g2, be2)


if __name__ == "__main__":
    key = jax.random.PRNGKey(0)
    kx, kp, kx2, km2 = jax.random.split(key, 4)
    params = make_params(kp)

    # --- primary small test (shapes consistent with the module) ---
    B, S = 2, 8
    x = jax.random.normal(kx, (B, S, D_MODEL), jnp.float32)
    mask = jnp.ones((B, 1, S), jnp.float32)
    mask = mask.at[1, 0, S - 2:].set(0.0)   # batch 1: last 2 key positions masked
    out = jax.block_until_ready(encoder_layer(x, mask, params))
    ref = reference_encoder_layer(x, mask, params)
    assert out.shape == (B, S, D_MODEL)
    assert jnp.allclose(out, ref, atol=1e-4, rtol=1e-4), "mismatch vs JAX reference (B=2)"

    # --- larger batch exercises the 128-row batch tiling, grid > 1 and the padding path ---
    B2 = 20
    x2 = jax.random.normal(kx2, (B2, S, D_MODEL), jnp.float32)
    mask2 = (jax.random.uniform(km2, (B2, 1, S)) > 0.2).astype(jnp.float32)
    mask2 = mask2.at[:, 0, 0].set(1.0)      # keep at least one valid key per batch element
    out2 = jax.block_until_ready(encoder_layer(x2, mask2, params))
    ref2 = reference_encoder_layer(x2, mask2, params)
    assert jnp.allclose(out2, ref2, atol=1e-4, rtol=1e-4), "mismatch vs JAX reference (B=20)"

    print("KERNEL_OK")
</pallas_src>

<mosaic_0001>
module attributes {stable_mosaic.version = 11 : i64} {
  func.func @encoder_layer_kernel(%arg0: i32, %arg1: memref<2x1x8xf32, #tpu.memory_space<vmem>>, %arg2: memref<2x8x32xf32, #tpu.memory_space<vmem>>, %arg3: memref<32x96xf32, #tpu.memory_space<vmem>>, %arg4: memref<32x32xf32, #tpu.memory_space<vmem>>, %arg5: memref<32x64xf32, #tpu.memory_space<vmem>>, %arg6: memref<64x32xf32, #tpu.memory_space<vmem>>, %arg7: memref<8x96xf32, #tpu.memory_space<vmem>>, %arg8: memref<2x8x32xf32, #tpu.memory_space<vmem>>) attributes {dimension_semantics = [#tpu.dimension_semantics<parallel>], iteration_bounds = array<i64: 1>, scalar_prefetch = 0 : i64, scratch_operands = 0 : i64, tpu.core_type = #tpu.core_type<tc>, window_params = [{transform_indices = @transform_0, window_bounds = array<i64: 2, 1, 8>}, {transform_indices = @transform_1, window_bounds = array<i64: 2, 8, 32>}, {pipeline_mode = #tpu.pipeline_mode<synchronous>, transform_indices = @transform_2, window_bounds = array<i64: 32, 96>}, {pipeline_mode = #tpu.pipeline_mode<synchronous>, transform_indices = @transform_3, window_bounds = array<i64: 32, 32>}, {pipeline_mode = #tpu.pipeline_mode<synchronous>, transform_indices = @transform_4, window_bounds = array<i64: 32, 64>}, {pipeline_mode = #tpu.pipeline_mode<synchronous>, transform_indices = @transform_5, window_bounds = array<i64: 64, 32>}, {pipeline_mode = #tpu.pipeline_mode<synchronous>, transform_indices = @transform_6, window_bounds = array<i64: 8, 96>}, {transform_indices = @transform_7, window_bounds = array<i64: 2, 8, 32>}]} {
    %c0 = arith.constant 0 : index
    %c0_0 = arith.constant 0 : index
    %0 = vector.load %arg7[%c0, %c0_0] : memref<8x96xf32, #tpu.memory_space<vmem>>, vector<1x96xf32>
    %c1 = arith.constant 1 : index
    %c0_1 = arith.constant 0 : index
    %1 = vector.load %arg7[%c1, %c0_1] : memref<8x96xf32, #tpu.memory_space<vmem>>, vector<1x32xf32>
    %c2 = arith.constant 2 : index
    %c0_2 = arith.constant 0 : index
    %2 = vector.load %arg7[%c2, %c0_2] : memref<8x96xf32, #tpu.memory_space<vmem>>, vector<1x32xf32>
    %c3 = arith.constant 3 : index
    %c0_3 = arith.constant 0 : index
    %3 = vector.load %arg7[%c3, %c0_3] : memref<8x96xf32, #tpu.memory_space<vmem>>, vector<1x32xf32>
    %c4 = arith.constant 4 : index
    %c0_4 = arith.constant 0 : index
    %4 = vector.load %arg7[%c4, %c0_4] : memref<8x96xf32, #tpu.memory_space<vmem>>, vector<1x64xf32>
    %c5 = arith.constant 5 : index
    %c0_5 = arith.constant 0 : index
    %5 = vector.load %arg7[%c5, %c0_5] : memref<8x96xf32, #tpu.memory_space<vmem>>, vector<1x32xf32>
    %c6 = arith.constant 6 : index
    %c0_6 = arith.constant 0 : index
    %6 = vector.load %arg7[%c6, %c0_6] : memref<8x96xf32, #tpu.memory_space<vmem>>, vector<1x32xf32>
    %c7 = arith.constant 7 : index
    %c0_7 = arith.constant 0 : index
    %7 = vector.load %arg7[%c7, %c0_7] : memref<8x96xf32, #tpu.memory_space<vmem>>, vector<1x32xf32>
    %c0_8 = arith.constant 0 : index
    %c0_9 = arith.constant 0 : index
    %c0_10 = arith.constant 0 : index
    %8 = vector.load %arg2[%c0_8, %c0_9, %c0_10] : memref<2x8x32xf32, #tpu.memory_space<vmem>>, vector<2x8x32xf32>
    %9 = vector.shape_cast %8 : vector<2x8x32xf32> to vector<16x32xf32>
    %c0_11 = arith.constant 0 : index
    %c0_12 = arith.constant 0 : index
    %10 = vector.load %arg3[%c0_11, %c0_12] : memref<32x96xf32, #tpu.memory_space<vmem>>, vector<32x96xf32>
    %cst = arith.constant dense<0.000000e+00> : vector<16x96xf32>
    %11 = tpu.matmul %9, %10, %cst {dimension_numbers = #tpu.dot_dimension_numbers<[1], [0], [0], [1], [0, 0, 1, 1], [], []>} : vector<16x32xf32>, vector<32x96xf32>, vector<16x96xf32> -> vector<16x96xf32>
    %12 = vector.broadcast %0 : vector<1x96xf32> to vector<16x96xf32>
    %13 = arith.addf %11, %12 : vector<16x96xf32>
    %14 = vector.extract_strided_slice %13 {offsets = [0, 0], sizes = [16, 32], strides = [1, 1]} : vector<16x96xf32> to vector<16x32xf32>
    %15 = vector.extract_strided_slice %13 {offsets = [0, 32], sizes = [16, 32], strides = [1, 1]} : vector<16x96xf32> to vector<16x32xf32>
    %16 = vector.extract_strided_slice %13 {offsets = [0, 64], sizes = [16, 32], strides = [1, 1]} : vector<16x96xf32> to vector<16x32xf32>
    %c0_13 = arith.constant 0 : index
    %c0_14 = arith.constant 0 : index
    %c0_15 = arith.constant 0 : index
    %17 = vector.load %arg1[%c0_13, %c0_14, %c0_15] : memref<2x1x8xf32, #tpu.memory_space<vmem>>, vector<2x1x8xf32>
    %cst_16 = arith.constant 0.000000e+00 : f32
    %18 = vector.broadcast %cst_16 : f32 to vector<2x1x8xf32>
    %19 = arith.cmpf oeq, %17, %18 : vector<2x1x8xf32>
    %cst_17 = arith.constant -1.000000e+09 : f32
    %cst_18 = arith.constant 0.000000e+00 : f32
    %20 = vector.broadcast %cst_17 : f32 to vector<2x1x8xf32>
    %21 = vector.broadcast %cst_18 : f32 to vector<2x1x8xf32>
    %22 = arith.select %19, %20, %21 : vector<2x1x8xi1>, vector<2x1x8xf32>
    %cst_19 = arith.constant 0.000000e+00 : f32
    %23 = vector.broadcast %cst_19 : f32 to vector<16x32xf32>
    %24 = vector.extract_strided_slice %14 {offsets = [0, 0], sizes = [16, 8], strides = [1, 1]} : vector<16x32xf32> to vector<16x8xf32>
    %25 = vector.shape_cast %24 : vector<16x8xf32> to vector<2x8x8xf32>
    %26 = vector.extract_strided_slice %15 {offsets = [0, 0], sizes = [16, 8], strides = [1, 1]} : vector<16x32xf32> to vector<16x8xf32>
    %27 = vector.shape_cast %26 : vector<16x8xf32> to vector<2x8x8xf32>
    %28 = vector.extract_strided_slice %16 {offsets = [0, 0], sizes = [16, 8], strides = [1, 1]} : vector<16x32xf32> to vector<16x8xf32>
    %29 = vector.shape_cast %28 : vector<16x8xf32> to vector<2x8x8xf32>
    "tpu.trace_start"() <{level = 10 : i32, message = "bqd,bkd->bqk"}> : () -> ()
    %cst_20 = arith.constant dense<0.000000e+00> : vector<2x8x8xf32>
    %30 = tpu.matmul %25, %27, %cst_20 {dimension_numbers = #tpu.dot_dimension_numbers<[2], [2], [1], [1], [0, 0, 0, 1, 1, 1], [0], [0]>} : vector<2x8x8xf32>, vector<2x8x8xf32>, vector<2x8x8xf32> -> vector<2x8x8xf32>
    "tpu.trace_stop"() : () -> ()
    %cst_21 = arith.constant 0.353553385 : f32
    %31 = vector.broadcast %cst_21 : f32 to vector<2x8x8xf32>
    %32 = arith.mulf %30, %31 : vector<2x8x8xf32>
    %33 = vector.broadcast %22 : vector<2x1x8xf32> to vector<2x8x8xf32>
    %34 = arith.addf %32, %33 : vector<2x8x8xf32>
    %cst_22 = arith.constant dense<0xFF800000> : vector<2x8xf32>
    %35 = vector.multi_reduction <maximumf>, %34, %cst_22 [2] : vector<2x8x8xf32> to vector<2x8xf32>
    %36 = vector.shape_cast %35 : vector<2x8xf32> to vector<2x8x1xf32>
    %37 = vector.broadcast %36 : vector<2x8x1xf32> to vector<2x8x8xf32>
    %38 = arith.subf %34, %37 : vector<2x8x8xf32>
    %39 = math.exp %38 : vector<2x8x8xf32>
    %cst_23 = arith.constant dense<0.000000e+00> : vector<2x8xf32>
    %40 = vector.multi_reduction <add>, %39, %cst_23 [2] : vector<2x8x8xf32> to vector<2x8xf32>
    %41 = vector.shape_cast %40 : vector<2x8xf32> to vector<2x8x1xf32>
    %42 = tpu.reciprocal %41 : vector<2x8x1xf32> -> vector<2x8x1xf32>
    %43 = vector.broadcast %42 : vector<2x8x1xf32> to vector<2x8x8xf32>
    %44 = arith.mulf %39, %43 : vector<2x8x8xf32>
    "tpu.trace_start"() <{level = 10 : i32, message = "bqk,bkd->bqd"}> : () -> ()
    %cst_24 = arith.constant dense<0.000000e+00> : vector<2x8x8xf32>
    %45 = tpu.matmul %44, %29, %cst_24 {dimension_numbers = #tpu.dot_dimension_numbers<[2], [1], [1], [2], [0, 0, 0, 1, 1, 2], [0], [0]>} : vector<2x8x8xf32>, vector<2x8x8xf32>, vector<2x8x8xf32> -> vector<2x8x8xf32>
    "tpu.trace_stop"() : () -> ()
    %46 = vector.shape_cast %45 : vector<2x8x8xf32> to vector<16x8xf32>
    %c0_25 = arith.constant 0 : index
    %c0_26 = arith.constant 0 : index
    %47 = vector.load %arg4[%c0_25, %c0_26] : memref<32x32xf32, #tpu.memory_space<vmem>>, vector<8x32xf32>
    %cst_27 = arith.constant dense<0.000000e+00> : vector<16x32xf32>
    %48 = tpu.matmul %46, %47, %cst_27 {dimension_numbers = #tpu.dot_dimension_numbers<[1], [0], [0], [1], [0, 0, 1, 1], [], []>} : vector<16x8xf32>, vector<8x32xf32>, vector<16x32xf32> -> vector<16x32xf32>
    %49 = arith.addf %23, %48 : vector<16x32xf32>
    %50 = vector.extract_strided_slice %14 {offsets = [0, 8], sizes = [16, 8], strides = [1, 1]} : vector<16x32xf32> to vector<16x8xf32>
    %51 = vector.shape_cast %50 : vector<16x8xf32> to vector<2x8x8xf32>
    %52 = vector.extract_strided_slice %15 {offsets = [0, 8], sizes = [16, 8], strides = [1, 1]} : vector<16x32xf32> to vector<16x8xf32>
    %53 = vector.shape_cast %52 : vector<16x8xf32> to vector<2x8x8xf32>
    %54 = vector.extract_strided_slice %16 {offsets = [0, 8], sizes = [16, 8], strides = [1, 1]} : vector<16x32xf32> to vector<16x8xf32>
    %55 = vector.shape_cast %54 : vector<16x8xf32> to vector<2x8x8xf32>
    "tpu.trace_start"() <{level = 10 : i32, message = "bqd,bkd->bqk"}> : () -> ()
    %cst_28 = arith.constant dense<0.000000e+00> : vector<2x8x8xf32>
    %56 = tpu.matmul %51, %53, %cst_28 {dimension_numbers = #tpu.dot_dimension_numbers<[2], [2], [1], [1], [0, 0, 0, 1, 1, 1], [0], [0]>} : vector<2x8x8xf32>, vector<2x8x8xf32>, vector<2x8x8xf32> -> vector<2x8x8xf32>
    "tpu.trace_stop"() : () -> ()
    %cst_29 = arith.constant 0.353553385 : f32
    %57 = vector.broadcast %cst_29 : f32 to vector<2x8x8xf32>
    %58 = arith.mulf %56, %57 : vector<2x8x8xf32>
    %59 = vector.broadcast %22 : vector<2x1x8xf32> to vector<2x8x8xf32>
    %60 = arith.addf %58, %59 : vector<2x8x8xf32>
    %cst_30 = arith.constant dense<0xFF800000> : vector<2x8xf32>
    %61 = vector.multi_reduction <maximumf>, %60, %cst_30 [2] : vector<2x8x8xf32> to vector<2x8xf32>
    %62 = vector.shape_cast %61 : vector<2x8xf32> to vector<2x8x1xf32>
    %63 = vector.broadcast %62 : vector<2x8x1xf32> to vector<2x8x8xf32>
    %64 = arith.subf %60, %63 : vector<2x8x8xf32>
    %65 = math.exp %64 : vector<2x8x8xf32>
    %cst_31 = arith.constant dense<0.000000e+00> : vector<2x8xf32>
    %66 = vector.multi_reduction <add>, %65, %cst_31 [2] : vector<2x8x8xf32> to vector<2x8xf32>
    %67 = vector.shape_cast %66 : vector<2x8xf32> to vector<2x8x1xf32>
    %68 = tpu.reciprocal %67 : vector<2x8x1xf32> -> vector<2x8x1xf32>
    %69 = vector.broadcast %68 : vector<2x8x1xf32> to vector<2x8x8xf32>
    %70 = arith.mulf %65, %69 : vector<2x8x8xf32>
    "tpu.trace_start"() <{level = 10 : i32, message = "bqk,bkd->bqd"}> : () -> ()
    %cst_32 = arith.constant dense<0.000000e+00> : vector<2x8x8xf32>
    %71 = tpu.matmul %70, %55, %cst_32 {dimension_numbers = #tpu.dot_dimension_numbers<[2], [1], [1], [2], [0, 0, 0, 1, 1, 2], [0], [0]>} : vector<2x8x8xf32>, vector<2x8x8xf32>, vector<2x8x8xf32> -> vector<2x8x8xf32>
    "tpu.trace_stop"() : () -> ()
    %72 = vector.shape_cast %71 : vector<2x8x8xf32> to vector<16x8xf32>
    %c8 = arith.constant 8 : index
    %c0_33 = arith.constant 0 : index
    %73 = vector.load %arg4[%c8, %c0_33] : memref<32x32xf32, #tpu.memory_space<vmem>>, vector<8x32xf32>
    %cst_34 = arith.constant dense<0.000000e+00> : vector<16x32xf32>
    %74 = tpu.matmul %72, %73, %cst_34 {dimension_numbers = #tpu.dot_dimension_numbers<[1], [0], [0], [1], [0, 0, 1, 1], [], []>} : vector<16x8xf32>, vector<8x32xf32>, vector<16x32xf32> -> vector<16x32xf32>
    %75 = arith.addf %49, %74 : vector<16x32xf32>
    %76 = vector.extract_strided_slice %14 {offsets = [0, 16], sizes = [16, 8], strides = [1, 1]} : vector<16x32xf32> to vector<16x8xf32>
    %77 = vector.shape_cast %76 : vector<16x8xf32> to vector<2x8x8xf32>
    %78 = vector.extract_strided_slice %15 {offsets = [0, 16], sizes = [16, 8], strides = [1, 1]} : vector<16x32xf32> to vector<16x8xf32>
    %79 = vector.shape_cast %78 : vector<16x8xf32> to vector<2x8x8xf32>
    %80 = vector.extract_strided_slice %16 {offsets = [0, 16], sizes = [16, 8], strides = [1, 1]} : vector<16x32xf32> to vector<16x8xf32>
    %81 = vector.shape_cast %80 : vector<16x8xf32> to vector<2x8x8xf32>
    "tpu.trace_start"() <{level = 10 : i32, message = "bqd,bkd->bqk"}> : () -> ()
    %cst_35 = arith.constant dense<0.000000e+00> : vector<2x8x8xf32>
    %82 = tpu.matmul %77, %79, %cst_35 {dimension_numbers = #tpu.dot_dimension_numbers<[2], [2], [1], [1], [0, 0, 0, 1, 1, 1], [0], [0]>} : vector<2x8x8xf32>, vector<2x8x8xf32>, vector<2x8x8xf32> -> vector<2x8x8xf32>
    "tpu.trace_stop"() : () -> ()
    %cst_36 = arith.constant 0.353553385 : f32
    %83 = vector.broadcast %cst_36 : f32 to vector<2x8x8xf32>
    %84 = arith.mulf %82, %83 : vector<2x8x8xf32>
    %85 = vector.broadcast %22 : vector<2x1x8xf32> to vector<2x8x8xf32>
    %86 = arith.addf %84, %85 : vector<2x8x8xf32>
    %cst_37 = arith.constant dense<0xFF800000> : vector<2x8xf32>
    %87 = vector.multi_reduction <maximumf>, %86, %cst_37 [2] : vector<2x8x8xf32> to vector<2x8xf32>
    %88 = vector.shape_cast %87 : vector<2x8xf32> to vector<2x8x1xf32>
    %89 = vector.broadcast %88 : vector<2x8x1xf32> to vector<2x8x8xf32>
    %90 = arith.subf %86, %89 : vector<2x8x8xf32>
    %91 = math.exp %90 : vector<2x8x8xf32>
    %cst_38 = arith.constant dense<0.000000e+00> : vector<2x8xf32>
    %92 = vector.multi_reduction <add>, %91, %cst_38 [2] : vector<2x8x8xf32> to vector<2x8xf32>
    %93 = vector.shape_cast %92 : vector<2x8xf32> to vector<2x8x1xf32>
    %94 = tpu.reciprocal %93 : vector<2x8x1xf32> -> vector<2x8x1xf32>
    %95 = vector.broadcast %94 : vector<2x8x1xf32> to vector<2x8x8xf32>
    %96 = arith.mulf %91, %95 : vector<2x8x8xf32>
    "tpu.trace_start"() <{level = 10 : i32, message = "bqk,bkd->bqd"}> : () -> ()
    %cst_39 = arith.constant dense<0.000000e+00> : vector<2x8x8xf32>
    %97 = tpu.matmul %96, %81, %cst_39 {dimension_numbers = #tpu.dot_dimension_numbers<[2], [1], [1], [2], [0, 0, 0, 1, 1, 2], [0], [0]>} : vector<2x8x8xf32>, vector<2x8x8xf32>, vector<2x8x8xf32> -> vector<2x8x8xf32>
    "tpu.trace_stop"() : () -> ()
    %98 = vector.shape_cast %97 : vector<2x8x8xf32> to vector<16x8xf32>
    %c16 = arith.constant 16 : index
    %c0_40 = arith.constant 0 : index
    %99 = vector.load %arg4[%c16, %c0_40] : memref<32x32xf32, #tpu.memory_space<vmem>>, vector<8x32xf32>
    %cst_41 = arith.constant dense<0.000000e+00> : vector<16x32xf32>
    %100 = tpu.matmul %98, %99, %cst_41 {dimension_numbers = #tpu.dot_dimension_numbers<[1], [0], [0], [1], [0, 0, 1, 1], [], []>} : vector<16x8xf32>, vector<8x32xf32>, vector<16x32xf32> -> vector<16x32xf32>
    %101 = arith.addf %75, %100 : vector<16x32xf32>
    %102 = vector.extract_strided_slice %14 {offsets = [0, 24], sizes = [16, 8], strides = [1, 1]} : vector<16x32xf32> to vector<16x8xf32>
    %103 = vector.shape_cast %102 : vector<16x8xf32> to vector<2x8x8xf32>
    %104 = vector.extract_strided_slice %15 {offsets = [0, 24], sizes = [16, 8], strides = [1, 1]} : vector<16x32xf32> to vector<16x8xf32>
    %105 = vector.shape_cast %104 : vector<16x8xf32> to vector<2x8x8xf32>
    %106 = vector.extract_strided_slice %16 {offsets = [0, 24], sizes = [16, 8], strides = [1, 1]} : vector<16x32xf32> to vector<16x8xf32>
    %107 = vector.shape_cast %106 : vector<16x8xf32> to vector<2x8x8xf32>
    "tpu.trace_start"() <{level = 10 : i32, message = "bqd,bkd->bqk"}> : () -> ()
    %cst_42 = arith.constant dense<0.000000e+00> : vector<2x8x8xf32>
    %108 = tpu.matmul %103, %105, %cst_42 {dimension_numbers = #tpu.dot_dimension_numbers<[2], [2], [1], [1], [0, 0, 0, 1, 1, 1], [0], [0]>} : vector<2x8x8xf32>, vector<2x8x8xf32>, vector<2x8x8xf32> -> vector<2x8x8xf32>
    "tpu.trace_stop"() : () -> ()
    %cst_43 = arith.constant 0.353553385 : f32
    %109 = vector.broadcast %cst_43 : f32 to vector<2x8x8xf32>
    %110 = arith.mulf %108, %109 : vector<2x8x8xf32>
    %111 = vector.broadcast %22 : vector<2x1x8xf32> to vector<2x8x8xf32>
    %112 = arith.addf %110, %111 : vector<2x8x8xf32>
    %cst_44 = arith.constant dense<0xFF800000> : vector<2x8xf32>
    %113 = vector.multi_reduction <maximumf>, %112, %cst_44 [2] : vector<2x8x8xf32> to vector<2x8xf32>
    %114 = vector.shape_cast %113 : vector<2x8xf32> to vector<2x8x1xf32>
    %115 = vector.broadcast %114 : vector<2x8x1xf32> to vector<2x8x8xf32>
    %116 = arith.subf %112, %115 : vector<2x8x8xf32>
    %117 = math.exp %116 : vector<2x8x8xf32>
    %cst_45 = arith.constant dense<0.000000e+00> : vector<2x8xf32>
    %118 = vector.multi_reduction <add>, %117, %cst_45 [2] : vector<2x8x8xf32> to vector<2x8xf32>
    %119 = vector.shape_cast %118 : vector<2x8xf32> to vector<2x8x1xf32>
    %120 = tpu.reciprocal %119 : vector<2x8x1xf32> -> vector<2x8x1xf32>
    %121 = vector.broadcast %120 : vector<2x8x1xf32> to vector<2x8x8xf32>
    %122 = arith.mulf %117, %121 : vector<2x8x8xf32>
    "tpu.trace_start"() <{level = 10 : i32, message = "bqk,bkd->bqd"}> : () -> ()
    %cst_46 = arith.constant dense<0.000000e+00> : vector<2x8x8xf32>
    %123 = tpu.matmul %122, %107, %cst_46 {dimension_numbers = #tpu.dot_dimension_numbers<[2], [1], [1], [2], [0, 0, 0, 1, 1, 2], [0], [0]>} : vector<2x8x8xf32>, vector<2x8x8xf32>, vector<2x8x8xf32> -> vector<2x8x8xf32>
    "tpu.trace_stop"() : () -> ()
    %124 = vector.shape_cast %123 : vector<2x8x8xf32> to vector<16x8xf32>
    %c24 = arith.constant 24 : index
    %c0_47 = arith.constant 0 : index
    %125 = vector.load %arg4[%c24, %c0_47] : memref<32x32xf32, #tpu.memory_space<vmem>>, vector<8x32xf32>
    %cst_48 = arith.constant dense<0.000000e+00> : vector<16x32xf32>
    %126 = tpu.matmul %124, %125, %cst_48 {dimension_numbers = #tpu.dot_dimension_numbers<[1], [0], [0], [1], [0, 0, 1, 1], [], []>} : vector<16x8xf32>, vector<8x32xf32>, vector<16x32xf32> -> vector<16x32xf32>
    %127 = arith.addf %101, %126 : vector<16x32xf32>
    %128 = arith.addf %9, %127 : vector<16x32xf32>
    %129 = vector.broadcast %1 : vector<1x32xf32> to vector<16x32xf32>
    %130 = arith.addf %128, %129 : vector<16x32xf32>
    %cst_49 = arith.constant dense<0.000000e+00> : vector<16xf32>
    %131 = vector.multi_reduction <add>, %130, %cst_49 [1] : vector<16x32xf32> to vector<16xf32>
    %132 = vector.shape_cast %131 : vector<16xf32> to vector<16x1xf32>
    %cst_50 = arith.constant 3.200000e+01 : f32
    %133 = vector.broadcast %cst_50 : f32 to vector<16x1xf32>
    %134 = arith.divf %132, %133 : vector<16x1xf32>
    %135 = vector.broadcast %134 : vector<16x1xf32> to vector<16x32xf32>
    %136 = arith.subf %130, %135 : vector<16x32xf32>
    %137 = arith.mulf %136, %136 : vector<16x32xf32>
    %cst_51 = arith.constant dense<0.000000e+00> : vector<16xf32>
    %138 = vector.multi_reduction <add>, %137, %cst_51 [1] : vector<16x32xf32> to vector<16xf32>
    %139 = vector.shape_cast %138 : vector<16xf32> to vector<16x1xf32>
    %cst_52 = arith.constant 3.200000e+01 : f32
    %140 = vector.broadcast %cst_52 : f32 to vector<16x1xf32>
    %141 = arith.divf %139, %140 : vector<16x1xf32>
    %142 = vector.broadcast %134 : vector<16x1xf32> to vector<16x32xf32>
    %143 = arith.subf %130, %142 : vector<16x32xf32>
    %cst_53 = arith.constant 9.99999974E-6 : f32
    %144 = vector.broadcast %cst_53 : f32 to vector<16x1xf32>
    %145 = arith.addf %141, %144 : vector<16x1xf32>
    %146 = math.rsqrt %145 : vector<16x1xf32>
    %147 = vector.broadcast %146 : vector<16x1xf32> to vector<16x32xf32>
    %148 = arith.mulf %143, %147 : vector<16x32xf32>
    %149 = vector.broadcast %2 : vector<1x32xf32> to vector<16x32xf32>
    %150 = arith.mulf %148, %149 : vector<16x32xf32>
    %151 = vector.broadcast %3 : vector<1x32xf32> to vector<16x32xf32>
    %152 = arith.addf %150, %151 : vector<16x32xf32>
    %c0_54 = arith.constant 0 : index
    %c0_55 = arith.constant 0 : index
    %153 = vector.load %arg5[%c0_54, %c0_55] : memref<32x64xf32, #tpu.memory_space<vmem>>, vector<32x64xf32>
    %cst_56 = arith.constant dense<0.000000e+00> : vector<16x64xf32>
    %154 = tpu.matmul %152, %153, %cst_56 {dimension_numbers = #tpu.dot_dimension_numbers<[1], [0], [0], [1], [0, 0, 1, 1], [], []>} : vector<16x32xf32>, vector<32x64xf32>, vector<16x64xf32> -> vector<16x64xf32>
    %155 = vector.broadcast %4 : vector<1x64xf32> to vector<16x64xf32>
    %156 = arith.addf %154, %155 : vector<16x64xf32>
    %cst_57 = arith.constant 0.000000e+00 : f32
    %157 = vector.broadcast %cst_57 : f32 to vector<16x64xf32>
    %158 = arith.maximumf %156, %157 : vector<16x64xf32>
    %c0_58 = arith.constant 0 : index
    %c0_59 = arith.constant 0 : index
    %159 = vector.load %arg6[%c0_58, %c0_59] : memref<64x32xf32, #tpu.memory_space<vmem>>, vector<64x32xf32>
    %cst_60 = arith.constant dense<0.000000e+00> : vector<16x32xf32>
    %160 = tpu.matmul %158, %159, %cst_60 {dimension_numbers = #tpu.dot_dimension_numbers<[1], [0], [0], [1], [0, 0, 1, 1], [], []>} : vector<16x64xf32>, vector<64x32xf32>, vector<16x32xf32> -> vector<16x32xf32>
    %161 = vector.broadcast %5 : vector<1x32xf32> to vector<16x32xf32>
    %162 = arith.addf %160, %161 : vector<16x32xf32>
    %163 = arith.addf %152, %162 : vector<16x32xf32>
    %cst_61 = arith.constant dense<0.000000e+00> : vector<16xf32>
    %164 = vector.multi_reduction <add>, %163, %cst_61 [1] : vector<16x32xf32> to vector<16xf32>
    %165 = vector.shape_cast %164 : vector<16xf32> to vector<16x1xf32>
    %cst_62 = arith.constant 3.200000e+01 : f32
    %166 = vector.broadcast %cst_62 : f32 to vector<16x1xf32>
    %167 = arith.divf %165, %166 : vector<16x1xf32>
    %168 = vector.broadcast %167 : vector<16x1xf32> to vector<16x32xf32>
    %169 = arith.subf %163, %168 : vector<16x32xf32>
    %170 = arith.mulf %169, %169 : vector<16x32xf32>
    %cst_63 = arith.constant dense<0.000000e+00> : vector<16xf32>
    %171 = vector.multi_reduction <add>, %170, %cst_63 [1] : vector<16x32xf32> to vector<16xf32>
    %172 = vector.shape_cast %171 : vector<16xf32> to vector<16x1xf32>
    %cst_64 = arith.constant 3.200000e+01 : f32
    %173 = vector.broadcast %cst_64 : f32 to vector<16x1xf32>
    %174 = arith.divf %172, %173 : vector<16x1xf32>
    %175 = vector.broadcast %167 : vector<16x1xf32> to vector<16x32xf32>
    %176 = arith.subf %163, %175 : vector<16x32xf32>
    %cst_65 = arith.constant 9.99999974E-6 : f32
    %177 = vector.broadcast %cst_65 : f32 to vector<16x1xf32>
    %178 = arith.addf %174, %177 : vector<16x1xf32>
    %179 = math.rsqrt %178 : vector<16x1xf32>
    %180 = vector.broadcast %179 : vector<16x1xf32> to vector<16x32xf32>
    %181 = arith.mulf %176, %180 : vector<16x32xf32>
    %182 = vector.broadcast %6 : vector<1x32xf32> to vector<16x32xf32>
    %183 = arith.mulf %181, %182 : vector<16x32xf32>
    %184 = vector.broadcast %7 : vector<1x32xf32> to vector<16x32xf32>
    %185 = arith.addf %183, %184 : vector<16x32xf32>
    %186 = vector.shape_cast %185 : vector<16x32xf32> to vector<2x8x32xf32>
    %c0_66 = arith.constant 0 : index
    %c0_67 = arith.constant 0 : index
    %c0_68 = arith.constant 0 : index
    %187 = vector.load %arg8[%c0_66, %c0_67, %c0_68] : memref<2x8x32xf32, #tpu.memory_space<vmem>>, vector<2x8x32xf32>
    tpu.vector_store %arg8[%c0_66, %c0_67, %c0_68], %186 {strides = array<i32>} : memref<2x8x32xf32, #tpu.memory_space<vmem>>, vector<2x8x32xf32>,
    return
  }
  func.func @transform_0(%arg0: i32) -> (i32, i32, i32) {
    %c0_i32 = arith.constant 0 : i32
    %c0_i32_0 = arith.constant 0 : i32
    %c0_i32_1 = arith.constant 0 : i32
    return %arg0, %c0_i32, %c0_i32_0 : i32, i32, i32
  }
  func.func @transform_1(%arg0: i32) -> (i32, i32, i32) {
    %c0_i32 = arith.constant 0 : i32
    %c0_i32_0 = arith.constant 0 : i32
    %c0_i32_1 = arith.constant 0 : i32
    return %arg0, %c0_i32, %c0_i32_0 : i32, i32, i32
  }
  func.func @transform_2(%arg0: i32) -> (i32, i32) {
    %c0_i32 = arith.constant 0 : i32
    %c0_i32_0 = arith.constant 0 : i32
    %c0_i32_1 = arith.constant 0 : i32
    return %c0_i32, %c0_i32_0 : i32, i32
  }
  func.func @transform_3(%arg0: i32) -> (i32, i32) {
    %c0_i32 = arith.constant 0 : i32
    %c0_i32_0 = arith.constant 0 : i32
    %c0_i32_1 = arith.constant 0 : i32
    return %c0_i32, %c0_i32_0 : i32, i32
  }
  func.func @transform_4(%arg0: i32) -> (i32, i32) {
    %c0_i32 = arith.constant 0 : i32
    %c0_i32_0 = arith.constant 0 : i32
    %c0_i32_1 = arith.constant 0 : i32
    return %c0_i32, %c0_i32_0 : i32, i32
  }
  func.func @transform_5(%arg0: i32) -> (i32, i32) {
    %c0_i32 = arith.constant 0 : i32
    %c0_i32_0 = arith.constant 0 : i32
    %c0_i32_1 = arith.constant 0 : i32
    return %c0_i32, %c0_i32_0 : i32, i32
  }
  func.func @transform_6(%arg0: i32) -> (i32, i32) {
    %c0_i32 = arith.constant 0 : i32
    %c0_i32_0 = arith.constant 0 : i32
    %c0_i32_1 = arith.constant 0 : i32
    return %c0_i32, %c0_i32_0 : i32, i32
  }
  func.func @transform_7(%arg0: i32) -> (i32, i32, i32) {
    %c0_i32 = arith.constant 0 : i32
    %c0_i32_0 = arith.constant 0 : i32
    %c0_i32_1 = arith.constant 0 : i32
    return %arg0, %c0_i32, %c0_i32_0 : i32, i32, i32
  }
}

</mosaic_0001>

<llo_original>
// kernel: tpu_custom_call.1
$region0: #{tpu_custom_call.1}
  #allocation0 [shape = 'u32[]', space=smem, size = 0x4, offset = 0x4, fixed_abs, tag = 'smem constant byte address 0x4 - core index']
  #allocation1 [shape = 'u32[72,128]{1,0:T(1,128)}', space=vmem, size = 0x9000, scoped, tag = 'internal scratch']
  %s0 = inlined_call_operand.hbm [shape: f32[2,1,8], index: 0, kind: input, shape index: {}]
  %s1 = inlined_call_operand.hbm [shape: f32[2,8,32], index: 1, kind: input, shape index: {}]
  %s2 = inlined_call_operand.vmem [shape: f32[32,96], index: 2, kind: input, shape index: {}]
  %s3 = inlined_call_operand.vmem [shape: f32[32,32], index: 3, kind: input, shape index: {}]
  %s4 = inlined_call_operand.vmem [shape: f32[32,64], index: 4, kind: input, shape index: {}]
  %s5 = inlined_call_operand.vmem [shape: f32[64,32], index: 5, kind: input, shape index: {}]
  %s6 = inlined_call_operand.hbm [shape: f32[8,96], index: 6, kind: input, shape index: {}]
  %s7 = inlined_call_operand.hbm [shape: f32[2,8,32], index: 7, kind: output, shape index: {}]
  %s8 = sld [smem:[#allocation0]]
  $region50: #{tpu_custom_call.1} parent=0
    _
  %s10 = ssub.s32 1, %s8
  %s11 = scalar_select 0, %s10, %s8
  $region1: #{tpu_custom_call.1} parent=0
    #allocation2 [shape = 'u8[1024]{0}', space=vmem, size = 0x400, scoped, tag = 'input window, operand 0, single buffered']
    #allocation3 [shape = 's32[1]{0}', space=sflag, size = 0x4, scoped, tag = 'scoped memory for tpu_custom_call.1']
    #allocation4 [shape = 's32[1]{0}', space=sflag, size = 0x4, scoped, tag = 'scoped memory for tpu_custom_call.1']
    #allocation5 [shape = 'u8[8192]{0}', space=vmem, size = 0x2000, scoped, tag = 'input window, operand 1, single buffered']
    #allocation6 [shape = 's32[1]{0}', space=sflag, size = 0x4, scoped, tag = 'scoped memory for tpu_custom_call.1']
    #allocation7 [shape = 'u8[4096]{0}', space=vmem, size = 0x1000, scoped, tag = 'input window, operand 6, single buffered']
    #allocation8 [shape = 'u8[8192]{0}', space=vmem, size = 0x2000, scoped, tag = 'output window, operand 0, single buffered']
    %12 = vsyncpa [#allocation3], 0
    %13 = vsyncpa [#allocation6], 0
    %14 = vsyncpa [#allocation4], 0
    // Predicated region
    $region2: #{tpu_custom_call.1} parent=1 // pred_check
      _
    $region3: #{tpu_custom_call.1} parent=1 // pred_check_branch
      %16 = sbr.rel (0) target = $region5
    $region4: #{tpu_custom_call.1} parent=1 // pred_region
      %18 = vsyncadd [#allocation3], 0
      %s19 = sshll.u32 %s0, 4
      %s20 = int_to_ptr.hbm [resolvable:$true] %s19
      %s21 = sshll.u32 [#allocation2], 4
      %s22 = int_to_ptr.vmem [resolvable:$true] %s21
      %27 = dma.hbm_to_vmem [thread:$0]  %s20, 32, %s22, [#allocation3], 16, 16, 1
    $region5: #{tpu_custom_call.1} parent=1 // pred_fallthru
      _
    // Predicated region
    $region6: #{tpu_custom_call.1} parent=1 // pred_check
      _
    $region7: #{tpu_custom_call.1} parent=1 // pred_check_branch
      %29 = sbr.rel (0) target = $region9
    $region8: #{tpu_custom_call.1} parent=1 // pred_region
      %31 = vsyncadd [#allocation6], 0
      %s32 = sshll.u32 %s1, 4
      %s33 = int_to_ptr.hbm [resolvable:$true] %s32
      %s34 = sshll.u32 [#allocation5], 4
      %s35 = int_to_ptr.vmem [resolvable:$true] %s34
      %40 = dma.hbm_to_vmem [thread:$0]  %s33, 256, %s35, [#allocation6], 128, 128, 8
    $region9: #{tpu_custom_call.1} parent=1 // pred_fallthru
      _
    // Predicated region
    $region10: #{tpu_custom_call.1} parent=1 // pred_check
      _
    $region11: #{tpu_custom_call.1} parent=1 // pred_check_branch
      %42 = sbr.rel (0) target = $region13
    $region12: #{tpu_custom_call.1} parent=1 // pred_region
      _
    $region13: #{tpu_custom_call.1} parent=1 // pred_fallthru
      _
    // Predicated region
    $region14: #{tpu_custom_call.1} parent=1 // pred_check
      _
    $region15: #{tpu_custom_call.1} parent=1 // pred_check_branch
      %44 = sbr.rel (0) target = $region17
    $region16: #{tpu_custom_call.1} parent=1 // pred_region
      _
    $region17: #{tpu_custom_call.1} parent=1 // pred_fallthru
      _
    // Predicated region
    $region18: #{tpu_custom_call.1} parent=1 // pred_check
      _
    $region19: #{tpu_custom_call.1} parent=1 // pred_check_branch
      %46 = sbr.rel (0) target = $region21
    $region20: #{tpu_custom_call.1} parent=1 // pred_region
      _
    $region21: #{tpu_custom_call.1} parent=1 // pred_fallthru
      _
    // Predicated region
    $region22: #{tpu_custom_call.1} parent=1 // pred_check
      _
    $region23: #{tpu_custom_call.1} parent=1 // pred_check_branch
      %48 = sbr.rel (0) target = $region25
    $region24: #{tpu_custom_call.1} parent=1 // pred_region
      _
    $region25: #{tpu_custom_call.1} parent=1 // pred_fallthru
      _
    // Predicated region
    $region26: #{tpu_custom_call.1} parent=1 // pred_check
      _
    $region27: #{tpu_custom_call.1} parent=1 // pred_check_branch
      %50 = sbr.rel (0) target = $region29
    $region28: #{tpu_custom_call.1} parent=1 // pred_region
      %52 = vsyncadd [#allocation6], 0
      %s54 = sshll.u32 %s6, 4
      %s55 = int_to_ptr.hbm [resolvable:$true] %s54
      %s56 = sshll.u32 [#allocation7], 4
      %s57 = int_to_ptr.vmem [resolvable:$true] %s56
      %59 = dma.hbm_to_vmem [thread:$0]  %s55, 128, %s57, [#allocation6]
    $region29: #{tpu_custom_call.1} parent=1 // pred_fallthru
      _
    // Predicated region
    $region30: #{tpu_custom_call.1} parent=1 // pred_check
      _
    $region31: #{tpu_custom_call.1} parent=1 // pred_check_branch
      %61 = sbr.rel (0) target = $region33
    $region32: #{tpu_custom_call.1} parent=1 // pred_region
      %63 = dma.done [#allocation3], 32
    $region33: #{tpu_custom_call.1} parent=1 // pred_fallthru
      _
    // Predicated region
    $region34: #{tpu_custom_call.1} parent=1 // pred_check
      _
    $region35: #{tpu_custom_call.1} parent=1 // pred_check_branch
      %65 = sbr.rel (0) target = $region37
    $region36: #{tpu_custom_call.1} parent=1 // pred_region
      %67 = dma.done [#allocation6], 256
    $region37: #{tpu_custom_call.1} parent=1 // pred_fallthru
      _
    // Predicated region
    $region38: #{tpu_custom_call.1} parent=1 // pred_check
      _
    $region39: #{tpu_custom_call.1} parent=1 // pred_check_branch
      %69 = sbr.rel (0) target = $region41
    $region40: #{tpu_custom_call.1} parent=1 // pred_region
      %71 = dma.done [#allocation6], 128
    $region41: #{tpu_custom_call.1} parent=1 // pred_fallthru
      _
    %v72 = vld [vmem:[#allocation7] sm:$0x1]
    %v73 = vld [vmem:[#allocation7 + $0x1] sm:$0x1]
    %v74 = vld [vmem:[#allocation7 + $0x2] sm:$0x1]
    %v75 = vld [vmem:[#allocation7 + $0x3] sm:$0x1]
    %v76 = vld [vmem:[#allocation7 + $0x4] sm:$0x1]
    %v77 = vld [vmem:[#allocation7 + $0x5] sm:$0x1]
    %v78 = vld [vmem:[#allocation7 + $0x6] sm:$0x1]
    %v79 = vld [vmem:[#allocation7 + $0x7] sm:$0x1]
    %v80 = vld [vmem:[#allocation5] sm:$0xff]
    %v81 = vld [vmem:[#allocation5 + $0x8] sm:$0xff]
    %v82 = vld [vmem:[%s2] sm:$0xff]
    %v83 = vld [vmem:[%s2 + $0x8] sm:$0xff]
    %v84 = vld [vmem:[%s2 + $0x10] sm:$0xff]
    %v85 = vld [vmem:[%s2 + $0x18] sm:$0xff]
    %v86 = vperm.slane %v72, 0
    %vm87 = vcmask 261120
    %v89 = vsel %vm87, %v80, 0
    %v92 = vsel %vm87, %v81, 0
    %94 = vmatpush.msra.mxu0 0.0
    %95 = vmatpush.msra.mxu0 0.0
    %96 = vmatpush.msra.mxu0 0.0
    %97 = vmatpush.msra.mxu0 0.0
    %98 = vmatpush.msra.mxu0 0.0
    %99 = vmatpush.msra.mxu0 0.0
    %100 = vmatpush.msra.mxu0 0.0
    %101 = vmatpush.msra.mxu0 0.0
    %102 = vmatpush.msra.mxu0 0.0
    %103 = vmatpush.msra.mxu0 0.0
    %104 = vmatpush.msra.mxu0 0.0
    %105 = vmatpush.msra.mxu0 0.0
    %106 = vmatpush.msra.mxu0 %v85
    %107 = vmatpush.msra.mxu0 %v84
    %108 = vmatpush.msra.mxu0 %v83
    %109 = vmatpush.msra.mxu0 %v82
    %110 = vmatmul.f32.gmra.mxu0 %v89
    %v111 = vpop.f32.mrf.mxu0
    %v112 = vadd.f32 %v86, %v111
    %113 = vmatmul.f32.gmra.mxu0 %v92
    %v114 = vpop.f32.mrf.mxu0
    %v115 = vadd.f32 %v86, %v114
    %116 = vdwg.mxu0
    %v117 = vld [vmem:[#allocation2] sm:$0x1]
    %v118 = vld [vmem:[#allocation2 + $0x1] sm:$0x1]
    %vm119 = vcmp.eq.f32.partialorder %v117, 0.0
    %vm120 = vcmp.eq.f32.partialorder %v118, 0.0
    %v121 = vsel %vm119, -1e+09, 0.0
    %v122 = vsel %vm120, -1e+09, 0.0
    %124 = vrot.lane.b32.xlu0 %v112, 96
    %v125 = vpop.permute.xlu0 %124
    %vm126 = vcmask 64512
    %v127 = vsel %vm126, %v112, 0
    %v129 = vsel %vm126, %v125, 0
    %131 = vmatpush.xpose.msra.mxu0 0.0
    %132 = vmatpush.xpose.msra.mxu0 0.0
    %133 = vmatpush.xpose.msra.mxu0 0.0
    %134 = vmatpush.xpose.msra.mxu0 0.0
    %135 = vmatpush.xpose.msra.mxu0 0.0
    %136 = vmatpush.xpose.msra.mxu0 0.0
    %137 = vmatpush.xpose.msra.mxu0 0.0
    %138 = vmatpush.xpose.msra.mxu0 0.0
    %139 = vmatpush.xpose.msra.mxu0 0.0
    %140 = vmatpush.xpose.msra.mxu0 0.0
    %141 = vmatpush.xpose.msra.mxu0 0.0
    %142 = vmatpush.xpose.msra.mxu0 0.0
    %143 = vmatpush.xpose.msra.mxu0 0.0
    %144 = vmatpush.xpose.msra.mxu0 0.0
    %145 = vmatpush.xpose.msra.mxu0 0.0
    %146 = vmatpush.xpose.msra.mxu0 %v129
    %147 = vmatmul.f32.gmra.mxu0 %v127
    %v148 = vpop.f32.mrf.mxu0
    %v149 = vadd.f32 0.0, %v148
    %150 = vdwg.mxu0
    %152 = vrot.lane.b32.xlu0 %v115, 96
    %v153 = vpop.permute.xlu0 %152
    %v154 = vsel %vm126, %v115, 0
    %v156 = vsel %vm126, %v153, 0
    %158 = vmatpush.xpose.msra.mxu0 0.0
    %159 = vmatpush.xpose.msra.mxu0 0.0
    %160 = vmatpush.xpose.msra.mxu0 0.0
    %161 = vmatpush.xpose.msra.mxu0 0.0
    %162 = vmatpush.xpose.msra.mxu0 0.0
    %163 = vmatpush.xpose.msra.mxu0 0.0
    %164 = vmatpush.xpose.msra.mxu0 0.0
    %165 = vmatpush.xpose.msra.mxu0 0.0
    %166 = vmatpush.xpose.msra.mxu0 0.0
    %167 = vmatpush.xpose.msra.mxu0 0.0
    %168 = vmatpush.xpose.msra.mxu0 0.0
    %169 = vmatpush.xpose.msra.mxu0 0.0
    %170 = vmatpush.xpose.msra.mxu0 0.0
    %171 = vmatpush.xpose.msra.mxu0 0.0
    %172 = vmatpush.xpose.msra.mxu0 0.0
    %173 = vmatpush.xpose.msra.mxu0 %v156
    %174 = vmatmul.f32.gmra.mxu0 %v154
    %v175 = vpop.f32.mrf.mxu0
    %v176 = vadd.f32 0.0, %v175
    %177 = vdwg.mxu0
    %v178 = vmul.f32 %v149, 0.35355338
    %v179 = vmul.f32 %v176, 0.35355338
    %v182 = vperm.slane %v121, 0
    %v183 = vperm.slane %v122, 0
    %v186 = vadd.f32 %v178, %v182
    %v187 = vadd.f32 %v179, %v183
    %v188 = vsel %vm126, %v186, -inf
    %189 = vmax.xlane.f32.xlu0 %v188
    %v190 = vpop.xlane.xlu0 %189
    %v191 = vsel %vm126, %v187, -inf
    %192 = vmax.xlane.f32.xlu0 %v191
    %v193 = vpop.xlane.xlu0 %192
    %v194 = vsub.f32 %v186, %v190
    %v195 = vsub.f32 %v187, %v193
    %v196 = vmul.f32 %v194, 1.442695
    %v197 = vpow.pop %v196
    %v198 = vmul.f32 %v195, 1.442695
    %v199 = vpow.pop %v198
    %v200 = vsel %vm126, %v197, 0.0
    %201 = vadd.xlane.f32.xlu0 %v200
    %v202 = vpop.xlane.xlu0 %201
    %v203 = vsel %vm126, %v199, 0.0
    %204 = vadd.xlane.f32.xlu0 %v203
    %v205 = vpop.xlane.xlu0 %204
    %v206 = vrcp.pop %v202
    %v207 = vmul.f32 %v202, %v206
    %v208 = vsub.f32 1.0, %v207
    %v209 = vmul.f32 %v206, %v208
    %v210 = vadd.f32 %v206, %v209
    %vm211 = vweird.f32 %v202
    %vm212 = vweird.f32 %v206
    %vm213 = vmor %vm211, %vm212
    %v214 = vsel %vm213, %v206, %v210
    %v215 = vand.u32 2147483647, %v202
    %vm216 = vcmp.eq.f32.partialorder %v215, 8.507059e+37
    %v217 = vand.u32 %v202, 2147483648
    %v218 = vor.u32 1.1754944e-38, %v217
    %v219 = vsel %vm216, %v218, %v214
    %v220 = vrcp.pop %v205
    %v221 = vmul.f32 %v205, %v220
    %v222 = vsub.f32 1.0, %v221
    %v223 = vmul.f32 %v220, %v222
    %v224 = vadd.f32 %v220, %v223
    %vm225 = vweird.f32 %v205
    %vm226 = vweird.f32 %v220
    %vm227 = vmor %vm225, %vm226
    %v228 = vsel %vm227, %v220, %v224
    %v229 = vand.u32 2147483647, %v205
    %vm230 = vcmp.eq.f32.partialorder %v229, 8.507059e+37
    %v231 = vand.u32 %v205, 2147483648
    %v232 = vor.u32 1.1754944e-38, %v231
    %v233 = vsel %vm230, %v232, %v228
    %v234 = vmul.f32 %v197, %v219
    %v235 = vmul.f32 %v199, %v233
    %236 = vrot.lane.b32.xlu0 %v112, 64
    %v237 = vpop.permute.xlu0 %236
    %v240 = vsel %vm126, %v234, 0
    %242 = vmatpush.msra.mxu0 0.0
    %243 = vmatpush.msra.mxu0 0.0
    %244 = vmatpush.msra.mxu0 0.0
    %245 = vmatpush.msra.mxu0 0.0
    %246 = vmatpush.msra.mxu0 0.0
    %247 = vmatpush.msra.mxu0 0.0
    %248 = vmatpush.msra.mxu0 0.0
    %249 = vmatpush.msra.mxu0 0.0
    %250 = vmatpush.msra.mxu0 0.0
    %251 = vmatpush.msra.mxu0 0.0
    %252 = vmatpush.msra.mxu0 0.0
    %253 = vmatpush.msra.mxu0 0.0
    %254 = vmatpush.msra.mxu0 0.0
    %255 = vmatpush.msra.mxu0 0.0
    %256 = vmatpush.msra.mxu0 0.0
    %257 = vmatpush.msra.mxu0 %v237
    %258 = vmatmul.f32.gmra.mxu0 %v240
    %v259 = vpop.f32.mrf.mxu0
    %v260 = vadd.f32 0.0, %v259
    %261 = vdwg.mxu0
    %262 = vrot.lane.b32.xlu0 %v115, 64
    %v263 = vpop.permute.xlu0 %262
    %v266 = vsel %vm126, %v235, 0
    %268 = vmatpush.msra.mxu0 0.0
    %269 = vmatpush.msra.mxu0 0.0
    %270 = vmatpush.msra.mxu0 0.0
    %271 = vmatpush.msra.mxu0 0.0
    %272 = vmatpush.msra.mxu0 0.0
    %273 = vmatpush.msra.mxu0 0.0
    %274 = vmatpush.msra.mxu0 0.0
    %275 = vmatpush.msra.mxu0 0.0
    %276 = vmatpush.msra.mxu0 0.0
    %277 = vmatpush.msra.mxu0 0.0
    %278 = vmatpush.msra.mxu0 0.0
    %279 = vmatpush.msra.mxu0 0.0
    %280 = vmatpush.msra.mxu0 0.0
    %281 = vmatpush.msra.mxu0 0.0
    %282 = vmatpush.msra.mxu0 0.0
    %283 = vmatpush.msra.mxu0 %v263
    %284 = vmatmul.f32.gmra.mxu0 %v266
    %v285 = vpop.f32.mrf.mxu0
    %v286 = vadd.f32 0.0, %v285
    %287 = vdwg.mxu0
    %v288 = vld [vmem:[%s3] sm:$0xff]
    %289 = vrot.lane.b32.xlu0 %v112, 120
    %v290 = vpop.permute.xlu0 %289
    %291 = vrot.lane.b32.xlu0 %v112, 88
    %v292 = vpop.permute.xlu0 %291
    %v293 = vsel %vm126, %v290, 0
    %v295 = vsel %vm126, %v292, 0
    %297 = vmatpush.xpose.msra.mxu0 0.0
    %298 = vmatpush.xpose.msra.mxu0 0.0
    %299 = vmatpush.xpose.msra.mxu0 0.0
    %300 = vmatpush.xpose.msra.mxu0 0.0
    %301 = vmatpush.xpose.msra.mxu0 0.0
    %302 = vmatpush.xpose.msra.mxu0 0.0
    %303 = vmatpush.xpose.msra.mxu0 0.0
    %304 = vmatpush.xpose.msra.mxu0 0.0
    %305 = vmatpush.xpose.msra.mxu0 0.0
    %306 = vmatpush.xpose.msra.mxu0 0.0
    %307 = vmatpush.xpose.msra.mxu0 0.0
    %308 = vmatpush.xpose.msra.mxu0 0.0
    %309 = vmatpush.xpose.msra.mxu0 0.0
    %310 = vmatpush.xpose.msra.mxu0 0.0
    %311 = vmatpush.xpose.msra.mxu0 0.0
    %312 = vmatpush.xpose.msra.mxu0 %v295
    %313 = vmatmul.f32.gmra.mxu0 %v293
    %v314 = vpop.f32.mrf.mxu0
    %v315 = vadd.f32 0.0, %v314
    %316 = vdwg.mxu0
    %317 = vrot.lane.b32.xlu0 %v115, 120
    %v318 = vpop.permute.xlu0 %317
    %319 = vrot.lane.b32.xlu0 %v115, 88
    %v320 = vpop.permute.xlu0 %319
    %v321 = vsel %vm126, %v318, 0
    %v323 = vsel %vm126, %v320, 0
    %325 = vmatpush.xpose.msra.mxu0 0.0
    %326 = vmatpush.xpose.msra.mxu0 0.0
    %327 = vmatpush.xpose.msra.mxu0 0.0
    %328 = vmatpush.xpose.msra.mxu0 0.0
    %329 = vmatpush.xpose.msra.mxu0 0.0
    %330 = vmatpush.xpose.msra.mxu0 0.0
    %331 = vmatpush.xpose.msra.mxu0 0.0
    %332 = vmatpush.xpose.msra.mxu0 0.0
    %333 = vmatpush.xpose.msra.mxu0 0.0
    %334 = vmatpush.xpose.msra.mxu0 0.0
    %335 = vmatpush.xpose.msra.mxu0 0.0
    %336 = vmatpush.xpose.msra.mxu0 0.0
    %337 = vmatpush.xpose.msra.mxu0 0.0
    %338 = vmatpush.xpose.msra.mxu0 0.0
    %339 = vmatpush.xpose.msra.mxu0 0.0
    %340 = vmatpush.xpose.msra.mxu0 %v323
    %341 = vmatmul.f32.gmra.mxu0 %v321
    %v342 = vpop.f32.mrf.mxu0
    %v343 = vadd.f32 0.0, %v342
    %344 = vdwg.mxu0
    %v345 = vmul.f32 %v315, 0.35355338
    %v346 = vmul.f32 %v343, 0.35355338
    %v347 = vadd.f32 %v345, %v182
    %v348 = vadd.f32 %v346, %v183
    %v349 = vsel %vm126, %v347, -inf
    %350 = vmax.xlane.f32.xlu0 %v349
    %v351 = vpop.xlane.xlu0 %350
    %v352 = vsel %vm126, %v348, -inf
    %353 = vmax.xlane.f32.xlu0 %v352
    %v354 = vpop.xlane.xlu0 %353
    %v355 = vsub.f32 %v347, %v351
    %v356 = vsub.f32 %v348, %v354
    %v357 = vmul.f32 %v355, 1.442695
    %v358 = vpow.pop %v357
    %v359 = vmul.f32 %v356, 1.442695
    %v360 = vpow.pop %v359
    %v361 = vsel %vm126, %v358, 0.0
    %362 = vadd.xlane.f32.xlu0 %v361
    %v363 = vpop.xlane.xlu0 %362
    %v364 = vsel %vm126, %v360, 0.0
    %365 = vadd.xlane.f32.xlu0 %v364
    %v366 = vpop.xlane.xlu0 %365
    %v367 = vrcp.pop %v363
    %v368 = vmul.f32 %v363, %v367
    %v369 = vsub.f32 1.0, %v368
    %v370 = vmul.f32 %v367, %v369
    %v371 = vadd.f32 %v367, %v370
    %vm372 = vweird.f32 %v363
    %vm373 = vweird.f32 %v367
    %vm374 = vmor %vm372, %vm373
    %v375 = vsel %vm374, %v367, %v371
    %v376 = vand.u32 2147483647, %v363
    %vm377 = vcmp.eq.f32.partialorder %v376, 8.507059e+37
    %v378 = vand.u32 %v363, 2147483648
    %v379 = vor.u32 1.1754944e-38, %v378
    %v380 = vsel %vm377, %v379, %v375
    %v381 = vrcp.pop %v366
    %v382 = vmul.f32 %v366, %v381
    %v383 = vsub.f32 1.0, %v382
    %v384 = vmul.f32 %v381, %v383
    %v385 = vadd.f32 %v381, %v384
    %vm386 = vweird.f32 %v366
    %vm387 = vweird.f32 %v381
    %vm388 = vmor %vm386, %vm387
    %v389 = vsel %vm388, %v381, %v385
    %v390 = vand.u32 2147483647, %v366
    %vm391 = vcmp.eq.f32.partialorder %v390, 8.507059e+37
    %v392 = vand.u32 %v366, 2147483648
    %v393 = vor.u32 1.1754944e-38, %v392
    %v394 = vsel %vm391, %v393, %v389
    %v395 = vmul.f32 %v358, %v380
    %v396 = vmul.f32 %v360, %v394
    %397 = vrot.lane.b32.xlu0 %v112, 56
    %v398 = vpop.permute.xlu0 %397
    %v401 = vsel %vm126, %v395, 0
    %403 = vmatpush.msra.mxu0 0.0
    %404 = vmatpush.msra.mxu0 0.0
    %405 = vmatpush.msra.mxu0 0.0
    %406 = vmatpush.msra.mxu0 0.0
    %407 = vmatpush.msra.mxu0 0.0
    %408 = vmatpush.msra.mxu0 0.0
    %409 = vmatpush.msra.mxu0 0.0
    %410 = vmatpush.msra.mxu0 0.0
    %411 = vmatpush.msra.mxu0 0.0
    %412 = vmatpush.msra.mxu0 0.0
    %413 = vmatpush.msra.mxu0 0.0
    %414 = vmatpush.msra.mxu0 0.0
    %415 = vmatpush.msra.mxu0 0.0
    %416 = vmatpush.msra.mxu0 0.0
    %417 = vmatpush.msra.mxu0 0.0
    %418 = vmatpush.msra.mxu0 %v398
    %419 = vmatmul.f32.gmra.mxu0 %v401
    %v420 = vpop.f32.mrf.mxu0
    %v421 = vadd.f32 0.0, %v420
    %422 = vdwg.mxu0
    %423 = vrot.lane.b32.xlu0 %v115, 56
    %v424 = vpop.permute.xlu0 %423
    %v427 = vsel %vm126, %v396, 0
    %429 = vmatpush.msra.mxu0 0.0
    %430 = vmatpush.msra.mxu0 0.0
    %431 = vmatpush.msra.mxu0 0.0
    %432 = vmatpush.msra.mxu0 0.0
    %433 = vmatpush.msra.mxu0 0.0
    %434 = vmatpush.msra.mxu0 0.0
    %435 = vmatpush.msra.mxu0 0.0
    %436 = vmatpush.msra.mxu0 0.0
    %437 = vmatpush.msra.mxu0 0.0
    %438 = vmatpush.msra.mxu0 0.0
    %439 = vmatpush.msra.mxu0 0.0
    %440 = vmatpush.msra.mxu0 0.0
    %441 = vmatpush.msra.mxu0 0.0
    %442 = vmatpush.msra.mxu0 0.0
    %443 = vmatpush.msra.mxu0 0.0
    %444 = vmatpush.msra.mxu0 %v424
    %445 = vmatmul.f32.gmra.mxu0 %v427
    %v446 = vpop.f32.mrf.mxu0
    %v447 = vadd.f32 0.0, %v446
    %448 = vdwg.mxu0
    %v449 = vld [vmem:[%s3 + $0x8] sm:$0xff]
    %v451 = vsel %vm126, %v421, 0
    %v454 = vsel %vm126, %v447, 0
    %456 = vmatpush.msra.mxu0 0.0
    %457 = vmatpush.msra.mxu0 0.0
    %458 = vmatpush.msra.mxu0 0.0
    %459 = vmatpush.msra.mxu0 0.0
    %460 = vmatpush.msra.mxu0 0.0
    %461 = vmatpush.msra.mxu0 0.0
    %462 = vmatpush.msra.mxu0 0.0
    %463 = vmatpush.msra.mxu0 0.0
    %464 = vmatpush.msra.mxu0 0.0
    %465 = vmatpush.msra.mxu0 0.0
    %466 = vmatpush.msra.mxu0 0.0
    %467 = vmatpush.msra.mxu0 0.0
    %468 = vmatpush.msra.mxu0 0.0
    %469 = vmatpush.msra.mxu0 0.0
    %470 = vmatpush.msra.mxu0 0.0
    %471 = vmatpush.msra.mxu0 %v449
    %472 = vmatmul.f32.gmra.mxu0 %v451
    %v473 = vpop.f32.mrf.mxu0
    %v474 = vadd.f32 0.0, %v473
    %475 = vmatmul.f32.gmra.mxu0 %v454
    %v476 = vpop.f32.mrf.mxu0
    %v477 = vadd.f32 0.0, %v476
    %478 = vdwg.mxu0
    %v480 = vsel %vm126, %v260, 0
    %v483 = vsel %vm126, %v286, 0
    %485 = vmatpush.msra.mxu0 0.0
    %486 = vmatpush.msra.mxu0 0.0
    %487 = vmatpush.msra.mxu0 0.0
    %488 = vmatpush.msra.mxu0 0.0
    %489 = vmatpush.msra.mxu0 0.0
    %490 = vmatpush.msra.mxu0 0.0
    %491 = vmatpush.msra.mxu0 0.0
    %492 = vmatpush.msra.mxu0 0.0
    %493 = vmatpush.msra.mxu0 0.0
    %494 = vmatpush.msra.mxu0 0.0
    %495 = vmatpush.msra.mxu0 0.0
    %496 = vmatpush.msra.mxu0 0.0
    %497 = vmatpush.msra.mxu0 0.0
    %498 = vmatpush.msra.mxu0 0.0
    %499 = vmatpush.msra.mxu0 0.0
    %500 = vmatpush.msra.mxu0 %v288
    %501 = vmatmul.f32.gmra.mxu0 %v480
    %v502 = vpop.f32.mrf.mxu0
    %v503 = vadd.f32 %v474, %v502
    %504 = vmatmul.f32.gmra.mxu0 %v483
    %v505 = vpop.f32.mrf.mxu0
    %v506 = vadd.f32 %v477, %v505
    %507 = vdwg.mxu0
    %508 = vrot.lane.b32.xlu0 %v112, 112
    %v509 = vpop.permute.xlu0 %508
    %510 = vrot.lane.b32.xlu0 %v112, 80
    %v511 = vpop.permute.xlu0 %510
    %v512 = vsel %vm126, %v509, 0
    %v514 = vsel %vm126, %v511, 0
    %516 = vmatpush.xpose.msra.mxu0 0.0
    %517 = vmatpush.xpose.msra.mxu0 0.0
    %518 = vmatpush.xpose.msra.mxu0 0.0
    %519 = vmatpush.xpose.msra.mxu0 0.0
    %520 = vmatpush.xpose.msra.mxu0 0.0
    %521 = vmatpush.xpose.msra.mxu0 0.0
    %522 = vmatpush.xpose.msra.mxu0 0.0
    %523 = vmatpush.xpose.msra.mxu0 0.0
    %524 = vmatpush.xpose.msra.mxu0 0.0
    %525 = vmatpush.xpose.msra.mxu0 0.0
    %526 = vmatpush.xpose.msra.mxu0 0.0
    %527 = vmatpush.xpose.msra.mxu0 0.0
    %528 = vmatpush.xpose.msra.mxu0 0.0
    %529 = vmatpush.xpose.msra.mxu0 0.0
    %530 = vmatpush.xpose.msra.mxu0 0.0
    %531 = vmatpush.xpose.msra.mxu0 %v514
    %532 = vmatmul.f32.gmra.mxu0 %v512
    %v533 = vpop.f32.mrf.mxu0
    %v534 = vadd.f32 0.0, %v533
    %535 = vdwg.mxu0
    %536 = vrot.lane.b32.xlu0 %v115, 112
    %v537 = vpop.permute.xlu0 %536
    %538 = vrot.lane.b32.xlu0 %v115, 80
    %v539 = vpop.permute.xlu0 %538
    %v540 = vsel %vm126, %v537, 0
    %v542 = vsel %vm126, %v539, 0
    %544 = vmatpush.xpose.msra.mxu0 0.0
    %545 = vmatpush.xpose.msra.mxu0 0.0
    %546 = vmatpush.xpose.msra.mxu0 0.0
    %547 = vmatpush.xpose.msra.mxu0 0.0
    %548 = vmatpush.xpose.msra.mxu0 0.0
    %549 = vmatpush.xpose.msra.mxu0 0.0
    %550 = vmatpush.xpose.msra.mxu0 0.0
    %551 = vmatpush.xpose.msra.mxu0 0.0
    %552 = vmatpush.xpose.msra.mxu0 0.0
    %553 = vmatpush.xpose.msra.mxu0 0.0
    %554 = vmatpush.xpose.msra.mxu0 0.0
    %555 = vmatpush.xpose.msra.mxu0 0.0
    %556 = vmatpush.xpose.msra.mxu0 0.0
    %557 = vmatpush.xpose.msra.mxu0 0.0
    %558 = vmatpush.xpose.msra.mxu0 0.0
    %559 = vmatpush.xpose.msra.mxu0 %v542
    %560 = vmatmul.f32.gmra.mxu0 %v540
    %v561 = vpop.f32.mrf.mxu0
    %v562 = vadd.f32 0.0, %v561
    %563 = vdwg.mxu0
    %v564 = vmul.f32 %v534, 0.35355338
    %v565 = vmul.f32 %v562, 0.35355338
    %v566 = vadd.f32 %v564, %v182
    %v567 = vadd.f32 %v565, %v183
    %v568 = vsel %vm126, %v566, -inf
    %569 = vmax.xlane.f32.xlu0 %v568
    %v570 = vpop.xlane.xlu0 %569
    %v571 = vsel %vm126, %v567, -inf
    %572 = vmax.xlane.f32.xlu0 %v571
    %v573 = vpop.xlane.xlu0 %572
    %v574 = vsub.f32 %v566, %v570
    %v575 = vsub.f32 %v567, %v573
    %v576 = vmul.f32 %v574, 1.442695
    %v577 = vpow.pop %v576
    %v578 = vmul.f32 %v575, 1.442695
    %v579 = vpow.pop %v578
    %v580 = vsel %vm126, %v577, 0.0
    %581 = vadd.xlane.f32.xlu0 %v580
    %v582 = vpop.xlane.xlu0 %581
    %v583 = vsel %vm126, %v579, 0.0
    %584 = vadd.xlane.f32.xlu0 %v583
    %v585 = vpop.xlane.xlu0 %584
    %v586 = vrcp.pop %v582
    %v587 = vmul.f32 %v582, %v586
    %v588 = vsub.f32 1.0, %v587
    %v589 = vmul.f32 %v586, %v588
    %v590 = vadd.f32 %v586, %v589
    %vm591 = vweird.f32 %v582
    %vm592 = vweird.f32 %v586
    %vm593 = vmor %vm591, %vm592
    %v594 = vsel %vm593, %v586, %v590
    %v595 = vand.u32 2147483647, %v582
    %vm596 = vcmp.eq.f32.partialorder %v595, 8.507059e+37
    %v597 = vand.u32 %v582, 2147483648
    %v598 = vor.u32 1.1754944e-38, %v597
    %v599 = vsel %vm596, %v598, %v594
    %v600 = vrcp.pop %v585
    %v601 = vmul.f32 %v585, %v600
    %v602 = vsub.f32 1.0, %v601
    %v603 = vmul.f32 %v600, %v602
    %v604 = vadd.f32 %v600, %v603
    %vm605 = vweird.f32 %v585
    %vm606 = vweird.f32 %v600
    %vm607 = vmor %vm605, %vm606
    %v608 = vsel %vm607, %v600, %v604
    %v609 = vand.u32 2147483647, %v585
    %vm610 = vcmp.eq.f32.partialorder %v609, 8.507059e+37
    %v611 = vand.u32 %v585, 2147483648
    %v612 = vor.u32 1.1754944e-38, %v611
    %v613 = vsel %vm610, %v612, %v608
    %v614 = vmul.f32 %v577, %v599
    %v615 = vmul.f32 %v579, %v613
    %616 = vrot.lane.b32.xlu0 %v112, 48
    %v617 = vpop.permute.xlu0 %616
    %v620 = vsel %vm126, %v614, 0
    %622 = vmatpush.msra.mxu0 0.0
    %623 = vmatpush.msra.mxu0 0.0
    %624 = vmatpush.msra.mxu0 0.0
    %625 = vmatpush.msra.mxu0 0.0
    %626 = vmatpush.msra.mxu0 0.0
    %627 = vmatpush.msra.mxu0 0.0
    %628 = vmatpush.msra.mxu0 0.0
    %629 = vmatpush.msra.mxu0 0.0
    %630 = vmatpush.msra.mxu0 0.0
    %631 = vmatpush.msra.mxu0 0.0
    %632 = vmatpush.msra.mxu0 0.0
    %633 = vmatpush.msra.mxu0 0.0
    %634 = vmatpush.msra.mxu0 0.0
    %635 = vmatpush.msra.mxu0 0.0
    %636 = vmatpush.msra.mxu0 0.0
    %637 = vmatpush.msra.mxu0 %v617
    %638 = vmatmul.f32.gmra.mxu0 %v620
    %v639 = vpop.f32.mrf.mxu0
    %v640 = vadd.f32 0.0, %v639
    %641 = vdwg.mxu0
    %642 = vrot.lane.b32.xlu0 %v115, 48
    %v643 = vpop.permute.xlu0 %642
    %v646 = vsel %vm126, %v615, 0
    %648 = vmatpush.msra.mxu0 0.0
    %649 = vmatpush.msra.mxu0 0.0
    %650 = vmatpush.msra.mxu0 0.0
    %651 = vmatpush.msra.mxu0 0.0
    %652 = vmatpush.msra.mxu0 0.0
    %653 = vmatpush.msra.mxu0 0.0
    %654 = vmatpush.msra.mxu0 0.0
    %655 = vmatpush.msra.mxu0 0.0
    %656 = vmatpush.msra.mxu0 0.0
    %657 = vmatpush.msra.mxu0 0.0
    %658 = vmatpush.msra.mxu0 0.0
    %659 = vmatpush.msra.mxu0 0.0
    %660 = vmatpush.msra.mxu0 0.0
    %661 = vmatpush.msra.mxu0 0.0
    %662 = vmatpush.msra.mxu0 0.0
    %663 = vmatpush.msra.mxu0 %v643
    %664 = vmatmul.f32.gmra.mxu0 %v646
    %v665 = vpop.f32.mrf.mxu0
    %v666 = vadd.f32 0.0, %v665
    %667 = vdwg.mxu0
    %v668 = vld [vmem:[%s3 + $0x10] sm:$0xff]
    %v670 = vsel %vm126, %v640, 0
    %v673 = vsel %vm126, %v666, 0
    %675 = vmatpush.msra.mxu0 0.0
    %676 = vmatpush.msra.mxu0 0.0
    %677 = vmatpush.msra.mxu0 0.0
    %678 = vmatpush.msra.mxu0 0.0
    %679 = vmatpush.msra.mxu0 0.0
    %680 = vmatpush.msra.mxu0 0.0
    %681 = vmatpush.msra.mxu0 0.0
    %682 = vmatpush.msra.mxu0 0.0
    %683 = vmatpush.msra.mxu0 0.0
    %684 = vmatpush.msra.mxu0 0.0
    %685 = vmatpush.msra.mxu0 0.0
    %686 = vmatpush.msra.mxu0 0.0
    %687 = vmatpush.msra.mxu0 0.0
    %688 = vmatpush.msra.mxu0 0.0
    %689 = vmatpush.msra.mxu0 0.0
    %690 = vmatpush.msra.mxu0 %v668
    %691 = vmatmul.f32.gmra.mxu0 %v670
    %v692 = vpop.f32.mrf.mxu0
    %v693 = vadd.f32 0.0, %v692
    %694 = vmatmul.f32.gmra.mxu0 %v673
    %v695 = vpop.f32.mrf.mxu0
    %v696 = vadd.f32 0.0, %v695
    %697 = vdwg.mxu0
    %v698 = vadd.f32 %v503, %v693
    %v699 = vadd.f32 %v506, %v696
    %700 = vrot.lane.b32.xlu0 %v112, 104
    %v701 = vpop.permute.xlu0 %700
    %702 = vrot.lane.b32.xlu0 %v112, 72
    %v703 = vpop.permute.xlu0 %702
    %v704 = vsel %vm126, %v701, 0
    %v706 = vsel %vm126, %v703, 0
    %708 = vmatpush.xpose.msra.mxu0 0.0
    %709 = vmatpush.xpose.msra.mxu0 0.0
    %710 = vmatpush.xpose.msra.mxu0 0.0
    %711 = vmatpush.xpose.msra.mxu0 0.0
    %712 = vmatpush.xpose.msra.mxu0 0.0
    %713 = vmatpush.xpose.msra.mxu0 0.0
    %714 = vmatpush.xpose.msra.mxu0 0.0
    %715 = vmatpush.xpose.msra.mxu0 0.0
    %716 = vmatpush.xpose.msra.mxu0 0.0
    %717 = vmatpush.xpose.msra.mxu0 0.0
    %718 = vmatpush.xpose.msra.mxu0 0.0
    %719 = vmatpush.xpose.msra.mxu0 0.0
    %720 = vmatpush.xpose.msra.mxu0 0.0
    %721 = vmatpush.xpose.msra.mxu0 0.0
    %722 = vmatpush.xpose.msra.mxu0 0.0
    %723 = vmatpush.xpose.msra.mxu0 %v706
    %724 = vmatmul.f32.gmra.mxu0 %v704
    %v725 = vpop.f32.mrf.mxu0
    %v726 = vadd.f32 0.0, %v725
    %727 = vdwg.mxu0
    %728 = vrot.lane.b32.xlu0 %v115, 104
    %v729 = vpop.permute.xlu0 %728
    %730 = vrot.lane.b32.xlu0 %v115, 72
    %v731 = vpop.permute.xlu0 %730
    %v732 = vsel %vm126, %v729, 0
    %v734 = vsel %vm126, %v731, 0
    %736 = vmatpush.xpose.msra.mxu0 0.0
    %737 = vmatpush.xpose.msra.mxu0 0.0
    %738 = vmatpush.xpose.msra.mxu0 0.0
    %739 = vmatpush.xpose.msra.mxu0 0.0
    %740 = vmatpush.xpose.msra.mxu0 0.0
    %741 = vmatpush.xpose.msra.mxu0 0.0
    %742 = vmatpush.xpose.msra.mxu0 0.0
    %743 = vmatpush.xpose.msra.mxu0 0.0
    %744 = vmatpush.xpose.msra.mxu0 0.0
    %745 = vmatpush.xpose.msra.mxu0 0.0
    %746 = vmatpush.xpose.msra.mxu0 0.0
    %747 = vmatpush.xpose.msra.mxu0 0.0
    %748 = vmatpush.xpose.msra.mxu0 0.0
    %749 = vmatpush.xpose.msra.mxu0 0.0
    %750 = vmatpush.xpose.msra.mxu0 0.0
    %751 = vmatpush.xpose.msra.mxu0 %v734
    %752 = vmatmul.f32.gmra.mxu0 %v732
    %v753 = vpop.f32.mrf.mxu0
    %v754 = vadd.f32 0.0, %v753
    %755 = vdwg.mxu0
    %v756 = vmul.f32 %v726, 0.35355338
    %v757 = vmul.f32 %v754, 0.35355338
    %v758 = vadd.f32 %v756, %v182
    %v759 = vadd.f32 %v757, %v183
    %v760 = vsel %vm126, %v758, -inf
    %761 = vmax.xlane.f32.xlu0 %v760
    %v762 = vpop.xlane.xlu0 %761
    %v763 = vsel %vm126, %v759, -inf
    %764 = vmax.xlane.f32.xlu0 %v763
    %v765 = vpop.xlane.xlu0 %764
    %v766 = vsub.f32 %v758, %v762
    %v767 = vsub.f32 %v759, %v765
    %v768 = vmul.f32 %v766, 1.442695
    %v769 = vpow.pop %v768
    %v770 = vmul.f32 %v767, 1.442695
    %v771 = vpow.pop %v770
    %v772 = vsel %vm126, %v769, 0.0
    %773 = vadd.xlane.f32.xlu0 %v772
    %v774 = vpop.xlane.xlu0 %773
    %v775 = vsel %vm126, %v771, 0.0
    %776 = vadd.xlane.f32.xlu0 %v775
    %v777 = vpop.xlane.xlu0 %776
    %v778 = vrcp.pop %v774
    %v779 = vmul.f32 %v774, %v778
    %v780 = vsub.f32 1.0, %v779
    %v781 = vmul.f32 %v778, %v780
    %v782 = vadd.f32 %v778, %v781
    %vm783 = vweird.f32 %v774
    %vm784 = vweird.f32 %v778
    %vm785 = vmor %vm783, %vm784
    %v786 = vsel %vm785, %v778, %v782
    %v787 = vand.u32 2147483647, %v774
    %vm788 = vcmp.eq.f32.partialorder %v787, 8.507059e+37
    %v789 = vand.u32 %v774, 2147483648
    %v790 = vor.u32 1.1754944e-38, %v789
    %v791 = vsel %vm788, %v790, %v786
    %v792 = vrcp.pop %v777
    %v793 = vmul.f32 %v777, %v792
    %v794 = vsub.f32 1.0, %v793
    %v795 = vmul.f32 %v792, %v794
    %v796 = vadd.f32 %v792, %v795
    %vm797 = vweird.f32 %v777
    %vm798 = vweird.f32 %v792
    %vm799 = vmor %vm797, %vm798
    %v800 = vsel %vm799, %v792, %v796
    %v801 = vand.u32 2147483647, %v777
    %vm802 = vcmp.eq.f32.partialorder %v801, 8.507059e+37
    %v803 = vand.u32 %v777, 2147483648
    %v804 = vor.u32 1.1754944e-38, %v803
    %v805 = vsel %vm802, %v804, %v800
    %v806 = vmul.f32 %v769, %v791
    %v807 = vmul.f32 %v771, %v805
    %808 = vrot.lane.b32.xlu0 %v112, 40
    %v809 = vpop.permute.xlu0 %808
    %v812 = vsel %vm126, %v806, 0
    %814 = vmatpush.msra.mxu0 0.0
    %815 = vmatpush.msra.mxu0 0.0
    %816 = vmatpush.msra.mxu0 0.0
    %817 = vmatpush.msra.mxu0 0.0
    %818 = vmatpush.msra.mxu0 0.0
    %819 = vmatpush.msra.mxu0 0.0
    %820 = vmatpush.msra.mxu0 0.0
    %821 = vmatpush.msra.mxu0 0.0
    %822 = vmatpush.msra.mxu0 0.0
    %823 = vmatpush.msra.mxu0 0.0
    %824 = vmatpush.msra.mxu0 0.0
    %825 = vmatpush.msra.mxu0 0.0
    %826 = vmatpush.msra.mxu0 0.0
    %827 = vmatpush.msra.mxu0 0.0
    %828 = vmatpush.msra.mxu0 0.0
    %829 = vmatpush.msra.mxu0 %v809
    %830 = vmatmul.f32.gmra.mxu0 %v812
    %v831 = vpop.f32.mrf.mxu0
    %v832 = vadd.f32 0.0, %v831
    %833 = vdwg.mxu0
    %834 = vrot.lane.b32.xlu0 %v115, 40
    %v835 = vpop.permute.xlu0 %834
    %v838 = vsel %vm126, %v807, 0
    %840 = vmatpush.msra.mxu0 0.0
    %841 = vmatpush.msra.mxu0 0.0
    %842 = vmatpush.msra.mxu0 0.0
    %843 = vmatpush.msra.mxu0 0.0
    %844 = vmatpush.msra.mxu0 0.0
    %845 = vmatpush.msra.mxu0 0.0
    %846 = vmatpush.msra.mxu0 0.0
    %847 = vmatpush.msra.mxu0 0.0
    %848 = vmatpush.msra.mxu0 0.0
    %849 = vmatpush.msra.mxu0 0.0
    %850 = vmatpush.msra.mxu0 0.0
    %851 = vmatpush.msra.mxu0 0.0
    %852 = vmatpush.msra.mxu0 0.0
    %853 = vmatpush.msra.mxu0 0.0
    %854 = vmatpush.msra.mxu0 0.0
    %855 = vmatpush.msra.mxu0 %v835
    %856 = vmatmul.f32.gmra.mxu0 %v838
    %v857 = vpop.f32.mrf.mxu0
    %v858 = vadd.f32 0.0, %v857
    %859 = vdwg.mxu0
    %v860 = vld [vmem:[%s3 + $0x18] sm:$0xff]
    %v862 = vsel %vm126, %v832, 0
    %v865 = vsel %vm126, %v858, 0
    %867 = vmatpush.msra.mxu0 0.0
    %868 = vmatpush.msra.mxu0 0.0
    %869 = vmatpush.msra.mxu0 0.0
    %870 = vmatpush.msra.mxu0 0.0
    %871 = vmatpush.msra.mxu0 0.0
    %872 = vmatpush.msra.mxu0 0.0
    %873 = vmatpush.msra.mxu0 0.0
    %874 = vmatpush.msra.mxu0 0.0
    %875 = vmatpush.msra.mxu0 0.0
    %876 = vmatpush.msra.mxu0 0.0
    %877 = vmatpush.msra.mxu0 0.0
    %878 = vmatpush.msra.mxu0 0.0
    %879 = vmatpush.msra.mxu0 0.0
    %880 = vmatpush.msra.mxu0 0.0
    %881 = vmatpush.msra.mxu0 0.0
    %882 = vmatpush.msra.mxu0 %v860
    %883 = vmatmul.f32.gmra.mxu0 %v862
    %v884 = vpop.f32.mrf.mxu0
    %v885 = vadd.f32 0.0, %v884
    %886 = vmatmul.f32.gmra.mxu0 %v865
    %v887 = vpop.f32.mrf.mxu0
    %v888 = vadd.f32 0.0, %v887
    %889 = vdwg.mxu0
    %v890 = vadd.f32 %v698, %v885
    %v891 = vadd.f32 %v699, %v888
    %v892 = vadd.f32 %v80, %v890
    %v893 = vadd.f32 %v81, %v891
    %v894 = vperm.slane %v73, 0
    %v895 = vadd.f32 %v892, %v894
    %v896 = vadd.f32 %v893, %v894
    %v897 = vsel %vm87, %v895, 0.0
    %898 = vadd.xlane.f32.xlu0 %v897
    %v899 = vpop.xlane.xlu0 %898
    %v900 = vsel %vm87, %v896, 0.0
    %901 = vadd.xlane.f32.xlu0 %v900
    %v902 = vpop.xlane.xlu0 %901
    %v903 = vrcp.pop 32.0
    %v904 = vmul.f32 32.0, %v903
    %v905 = vsub.f32 1.0, %v904
    %v906 = vmul.f32 %v903, %v905
    %v907 = vadd.f32 %v903, %v906
    %vm908 = vweird.f32 %v903
    %v909 = vsel %vm908, %v903, %v907
    %v910 = vmul.f32 %v899, %v909
    %v911 = vmul.f32 %v902, %v909
    %v912 = vsub.f32 %v895, %v910
    %v913 = vsub.f32 %v896, %v911
    %v914 = vmul.f32 %v912, %v912
    %v915 = vmul.f32 %v913, %v913
    %v916 = vsel %vm87, %v914, 0.0
    %917 = vadd.xlane.f32.xlu0 %v916
    %v918 = vpop.xlane.xlu0 %917
    %v919 = vsel %vm87, %v915, 0.0
    %920 = vadd.xlane.f32.xlu0 %v919
    %v921 = vpop.xlane.xlu0 %920
    %v922 = vmul.f32 %v918, %v909
    %v923 = vmul.f32 %v921, %v909
    %v924 = vadd.f32 %v922, 1e-05
    %v925 = vadd.f32 %v923, 1e-05
    %v926 = vrsqrt.pop %v924
    %v927 = vmul.f32 %v926, %v924
    %v928 = vmul.f32 %v927, %v926
    %v929 = vmul.f32 0.5, %v928
    %v930 = vsub.f32 1.5, %v929
    %v931 = vmul.f32 %v926, %v930
    %vm932 = vweird.f32 %v924
    %vm933 = vweird.f32 %v926
    %vm934 = vmor %vm932, %vm933
    %v935 = vsel %vm934, %v926, %v931
    %v936 = vrsqrt.pop %v925
    %v937 = vmul.f32 %v936, %v925
    %v938 = vmul.f32 %v937, %v936
    %v939 = vmul.f32 0.5, %v938
    %v940 = vsub.f32 1.5, %v939
    %v941 = vmul.f32 %v936, %v940
    %vm942 = vweird.f32 %v925
    %vm943 = vweird.f32 %v936
    %vm944 = vmor %vm942, %vm943
    %v945 = vsel %vm944, %v936, %v941
    %v946 = vmul.f32 %v912, %v935
    %v947 = vmul.f32 %v913, %v945
    %v948 = vperm.slane %v74, 0
    %v949 = vmul.f32 %v946, %v948
    %v950 = vmul.f32 %v947, %v948
    %v951 = vperm.slane %v75, 0
    %v952 = vadd.f32 %v949, %v951
    %v953 = vadd.f32 %v950, %v951
    %v954 = vld [vmem:[%s4] sm:$0xff]
    %v955 = vld [vmem:[%s4 + $0x8] sm:$0xff]
    %v956 = vld [vmem:[%s4 + $0x10] sm:$0xff]
    %v957 = vld [vmem:[%s4 + $0x18] sm:$0xff]
    %v958 = vperm.slane %v76, 0
    %v960 = vsel %vm87, %v952, 0
    %v963 = vsel %vm87, %v953, 0
    %965 = vmatpush.msra.mxu0 0.0
    %966 = vmatpush.msra.mxu0 0.0
    %967 = vmatpush.msra.mxu0 0.0
    %968 = vmatpush.msra.mxu0 0.0
    %969 = vmatpush.msra.mxu0 0.0
    %970 = vmatpush.msra.mxu0 0.0
    %971 = vmatpush.msra.mxu0 0.0
    %972 = vmatpush.msra.mxu0 0.0
    %973 = vmatpush.msra.mxu0 0.0
    %974 = vmatpush.msra.mxu0 0.0
    %975 = vmatpush.msra.mxu0 0.0
    %976 = vmatpush.msra.mxu0 0.0
    %977 = vmatpush.msra.mxu0 %v957
    %978 = vmatpush.msra.mxu0 %v956
    %979 = vmatpush.msra.mxu0 %v955
    %980 = vmatpush.msra.mxu0 %v954
    %981 = vmatmul.f32.gmra.mxu0 %v960
    %v982 = vpop.f32.mrf.mxu0
    %v983 = vadd.f32 %v958, %v982
    %984 = vmatmul.f32.gmra.mxu0 %v963
    %v985 = vpop.f32.mrf.mxu0
    %v986 = vadd.f32 %v958, %v985
    %987 = vdwg.mxu0
    %v988 = vmax.f32 %v983, 0.0
    %v989 = vmax.f32 %v986, 0.0
    %v990 = vld [vmem:[%s5] sm:$0xff]
    %v991 = vld [vmem:[%s5 + $0x8] sm:$0xff]
    %v992 = vld [vmem:[%s5 + $0x10] sm:$0xff]
    %v993 = vld [vmem:[%s5 + $0x18] sm:$0xff]
    %v994 = vld [vmem:[%s5 + $0x20] sm:$0xff]
    %v995 = vld [vmem:[%s5 + $0x28] sm:$0xff]
    %v996 = vld [vmem:[%s5 + $0x30] sm:$0xff]
    %v997 = vld [vmem:[%s5 + $0x38] sm:$0xff]
    %v998 = vperm.slane %v77, 0
    %vm999 = vcmask 523264
    %v1001 = vsel %vm999, %v988, 0
    %v1004 = vsel %vm999, %v989, 0
    %1006 = vmatpush.msra.mxu0 0.0
    %1007 = vmatpush.msra.mxu0 0.0
    %1008 = vmatpush.msra.mxu0 0.0
    %1009 = vmatpush.msra.mxu0 0.0
    %1010 = vmatpush.msra.mxu0 0.0
    %1011 = vmatpush.msra.mxu0 0.0
    %1012 = vmatpush.msra.mxu0 0.0
    %1013 = vmatpush.msra.mxu0 0.0
    %1014 = vmatpush.msra.mxu0 %v997
    %1015 = vmatpush.msra.mxu0 %v996
    %1016 = vmatpush.msra.mxu0 %v995
    %1017 = vmatpush.msra.mxu0 %v994
    %1018 = vmatpush.msra.mxu0 %v993
    %1019 = vmatpush.msra.mxu0 %v992
    %1020 = vmatpush.msra.mxu0 %v991
    %1021 = vmatpush.msra.mxu0 %v990
    %1022 = vmatmul.f32.gmra.mxu0 %v1001
    %v1023 = vpop.f32.mrf.mxu0
    %v1024 = vadd.f32 %v998, %v1023
    %1025 = vmatmul.f32.gmra.mxu0 %v1004
    %v1026 = vpop.f32.mrf.mxu0
    %v1027 = vadd.f32 %v998, %v1026
    %1028 = vdwg.mxu0
    %v1029 = vadd.f32 %v952, %v1024
    %v1030 = vadd.f32 %v953, %v1027
    %v1031 = vsel %vm87, %v1029, 0.0
    %1032 = vadd.xlane.f32.xlu0 %v1031
    %v1033 = vpop.xlane.xlu0 %1032
    %v1034 = vsel %vm87, %v1030, 0.0
    %1035 = vadd.xlane.f32.xlu0 %v1034
    %v1036 = vpop.xlane.xlu0 %1035
    %v1037 = vmul.f32 %v1033, %v909
    %v1038 = vmul.f32 %v1036, %v909
    %v1039 = vsub.f32 %v1029, %v1037
    %v1040 = vsub.f32 %v1030, %v1038
    %v1041 = vmul.f32 %v1039, %v1039
    %v1042 = vmul.f32 %v1040, %v1040
    %v1043 = vsel %vm87, %v1041, 0.0
    %1044 = vadd.xlane.f32.xlu0 %v1043
    %v1045 = vpop.xlane.xlu0 %1044
    %v1046 = vsel %vm87, %v1042, 0.0
    %1047 = vadd.xlane.f32.xlu0 %v1046
    %v1048 = vpop.xlane.xlu0 %1047
    %v1049 = vmul.f32 %v1045, %v909
    %v1050 = vmul.f32 %v1048, %v909
    %v1051 = vadd.f32 %v1049, 1e-05
    %v1052 = vadd.f32 %v1050, 1e-05
    %v1053 = vrsqrt.pop %v1051
    %v1054 = vmul.f32 %v1053, %v1051
    %v1055 = vmul.f32 %v1054, %v1053
    %v1056 = vmul.f32 0.5, %v1055
    %v1057 = vsub.f32 1.5, %v1056
    %v1058 = vmul.f32 %v1053, %v1057
    %vm1059 = vweird.f32 %v1051
    %vm1060 = vweird.f32 %v1053
    %vm1061 = vmor %vm1059, %vm1060
    %v1062 = vsel %vm1061, %v1053, %v1058
    %v1063 = vrsqrt.pop %v1052
    %v1064 = vmul.f32 %v1063, %v1052
    %v1065 = vmul.f32 %v1064, %v1063
    %v1066 = vmul.f32 0.5, %v1065
    %v1067 = vsub.f32 1.5, %v1066
    %v1068 = vmul.f32 %v1063, %v1067
    %vm1069 = vweird.f32 %v1052
    %vm1070 = vweird.f32 %v1063
    %vm1071 = vmor %vm1069, %vm1070
    %v1072 = vsel %vm1071, %v1063, %v1068
    %v1073 = vmul.f32 %v1039, %v1062
    %v1074 = vmul.f32 %v1040, %v1072
    %v1075 = vperm.slane %v78, 0
    %v1076 = vmul.f32 %v1073, %v1075
    %v1077 = vmul.f32 %v1074, %v1075
    %v1078 = vperm.slane %v79, 0
    %v1079 = vadd.f32 %v1076, %v1078
    %v1080 = vadd.f32 %v1077, %v1078
    %1081 = vst.msk [vmem:[#allocation8] sm:$0xff] %vm87, %v1079
    %1082 = vst.msk [vmem:[#allocation8 + $0x8] sm:$0xff] %vm87, %v1080
    // Predicated region
    $region42: #{tpu_custom_call.1} parent=1 // pred_check
      _
    $region43: #{tpu_custom_call.1} parent=1 // pred_check_branch
      %1084 = sbr.rel (0) target = $region45
    $region44: #{tpu_custom_call.1} parent=1 // pred_region
      %1086 = vsyncadd [#allocation4], 0
      %s1087 = sshll.u32 [#allocation8], 4
      %s1088 = int_to_ptr.vmem [resolvable:$true] %s1087
      %s1089 = sshll.u32 %s7, 4
      %s1090 = int_to_ptr.hbm [resolvable:$true] %s1089
      %1095 = dma.vmem_to_hbm [thread:$0]  %s1088, 256, %s1090, [#allocation4], 128, 128, 8
    $region45: #{tpu_custom_call.1} parent=1 // pred_fallthru
      _
    // Predicated region
    $region46: #{tpu_custom_call.1} parent=1 // pred_check
      _
    $region47: #{tpu_custom_call.1} parent=1 // pred_check_branch
      %1097 = sbr.rel (0) target = $region49
    $region48: #{tpu_custom_call.1} parent=1 // pred_region
      %1099 = dma.done [#allocation4], 256
    $region49: #{tpu_custom_call.1} parent=1 // pred_fallthru
      _
    %1100 = vsyncpa [#allocation3], 1
    %1101 = vsyncpa [#allocation6], 1
    %1102 = vsyncpa [#allocation4], 1

</llo_original>
